<compile_context>
chip_gen: v6e
topology: v6e:2x2x1
jax: 0.10.0
libtpu: 0.0.40
codegen_flags: <defaults>
</compile_context>

<pallas_src>
import math

import jax
import jax.numpy as jnp
from jax.experimental import pallas as pl
from jax.experimental.pallas import tpu as pltpu


def _layernorm(z, gamma, beta, eps=1e-5):
    mu = jnp.mean(z, axis=-1, keepdims=True)
    var = jnp.mean((z - mu) * (z - mu), axis=-1, keepdims=True)
    return (z - mu) * jax.lax.rsqrt(var + eps) * gamma + beta


def _make_encoder_kernel(seq_len, d_model, num_heads, q_tile):
    S, D, H, TQ = seq_len, d_model, num_heads, q_tile
    dh = D // H
    nqt = S // TQ
    scale = 1.0 / math.sqrt(dh)

    def kernel(x_full_ref, x_tile_ref, bias_ref,
               wqkv_ref, bqkv_ref, wo_ref, bo_ref,
               ln1_g_ref, ln1_b_ref,
               w1_ref, b1_ref, w2_ref, b2_ref,
               ln2_g_ref, ln2_b_ref,
               out_ref,
               q_s, k_s, v_s, qh_s, ao_s):
        qi = pl.program_id(1)

        # ---- once per batch element: fused QKV projection ----------------
        @pl.when(qi == 0)
        def _():
            x = x_full_ref[0].astype(jnp.bfloat16)                  # (S, D)
            qkv = jnp.dot(x, wqkv_ref[...],
                          preferred_element_type=jnp.float32)       # (S, 3D) f32
            qkv = (qkv + bqkv_ref[0]).astype(jnp.bfloat16)
            for t in range(nqt):                                    # static unroll
                q_s[t] = qkv[t * TQ:(t + 1) * TQ, 0:D]              # Q, per tile
            for h in range(H):                                      # head-major K/V
                k_s[h] = qkv[:, D + h * dh:D + (h + 1) * dh]
                v_s[h] = qkv[:, 2 * D + h * dh:2 * D + (h + 1) * dh]

        # ---- per q-tile: multi-head attention -----------------------------
        q_t = q_s[qi]                                               # (TQ, D) bf16
        for h in range(H):                                          # head-major Q
            qh_s[h] = q_t[:, h * dh:(h + 1) * dh]
        qh = qh_s[...]                                              # (H, TQ, dh)
        kh = k_s[...]                                               # (H, S,  dh)
        vh = v_s[...]                                               # (H, S,  dh)

        s = jnp.einsum('hqd,hkd->hqk', qh, kh,
                       preferred_element_type=jnp.float32) * scale  # (H, TQ, S)
        s = s + bias_ref[0].astype(jnp.float32)[None, :, :]         # additive mask
        m = jnp.max(s, axis=-1, keepdims=True)
        p = jnp.exp(s - m)
        l = jnp.sum(p, axis=-1, keepdims=True)
        o = jnp.einsum('hqk,hkd->hqd', p.astype(jnp.bfloat16), vh,
                       preferred_element_type=jnp.float32)          # (H, TQ, dh)
        o = o * pl.reciprocal(l, approx=True)                       # softmax /= sum
        for h in range(H):                                          # merge heads
            ao_s[:, h * dh:(h + 1) * dh] = o[h].astype(jnp.bfloat16)

        attn = jnp.dot(ao_s[...], wo_ref[...],
                       preferred_element_type=jnp.float32) + bo_ref[0]

        # residual + LayerNorm  (dropout == identity)
        x_t = x_tile_ref[0]                                         # (TQ, D) f32
        h1 = _layernorm(x_t + attn, ln1_g_ref[0], ln1_b_ref[0])

        # ---- position-wise feed-forward -----------------------------------
        ff = jnp.dot(h1.astype(jnp.bfloat16), w1_ref[...],
                     preferred_element_type=jnp.float32) + b1_ref[0]
        ff = jnp.maximum(ff, 0.0)                                   # ReLU
        ff = jnp.dot(ff.astype(jnp.bfloat16), w2_ref[...],
                     preferred_element_type=jnp.float32) + b2_ref[0]

        out_ref[0] = _layernorm(h1 + ff, ln2_g_ref[0], ln2_b_ref[0])

    return kernel


def _vmem_limit_bytes(S, D, F, TQ, H):
    dh = D // H
    bf, f4 = 2, 4
    weights = bf * (3 * D * D + D * D + 2 * D * F)          # bf16 weights
    small = f4 * (3 * D + D + F + D + 4 * D)                # biases + LN params
    blocks = f4 * (S * D + 2 * TQ * D) + bf * (TQ * S)      # x blocks, mask, out
    scratch = bf * (S * D + 2 * H * S * dh + H * TQ * dh + TQ * D)
    temps = f4 * (3 * S * D + 3 * H * TQ * S + 2 * H * TQ * dh
                  + 2 * TQ * F + 8 * TQ * D)
    total = 2 * (weights + small + blocks) + scratch + temps  # double-buffered I/O
    return int(min(max(2 * total + (8 << 20), 32 << 20), 64 << 20))


def encoder_block(x, mask, params, num_heads, q_tile=128):
    """x: (B, S, D) f32, mask: (B, S, S) (0 => masked out, 1 => attend)."""
    B, S, D = x.shape
    F = params["w1"].shape[1]
    H = num_heads
    assert D % H == 0
    # One tile when S is small; otherwise 128-row q tiles (TQ must divide S;
    # for TQ < S the (8,128)/(16,128) block divisibility rules require
    # TQ % 16 == 0 and S % 128 == 0).
    TQ = S if S <= q_tile else q_tile
    assert S % TQ == 0, "seq_len must be a multiple of the q tile"
    nqt = S // TQ
    dh = D // H
    bf16 = jnp.bfloat16

    # Fused QKV weight/bias; bf16 weights feed the MXU (f32 accumulation).
    wqkv = jnp.concatenate(
        [params["wq"], params["wk"], params["wv"]], axis=1).astype(bf16)
    bqkv = jnp.concatenate(
        [params["bq"], params["bk"], params["bv"]], axis=1).astype(jnp.float32)
    wo = params["wo"].astype(bf16)
    w1 = params["w1"].astype(bf16)
    w2 = params["w2"].astype(bf16)

    # Additive attention bias precomputed once (0 keep / -1e9 masked), bf16
    # transport halves the (B,S,S) DMA and removes the in-kernel compare.
    attn_bias = jnp.where(mask == 0, jnp.float32(-1e9),
                          jnp.float32(0.0)).astype(bf16)

    kernel = _make_encoder_kernel(S, D, H, TQ)
    full = lambda shape: pl.BlockSpec(shape, lambda b, q: (0,) * len(shape))

    in_specs = [
        pl.BlockSpec((1, S, D), lambda b, q: (b, 0, 0)),    # x (full seq -> QKV)
        pl.BlockSpec((1, TQ, D), lambda b, q: (b, q, 0)),   # x (q tile -> residual)
        pl.BlockSpec((1, TQ, S), lambda b, q: (b, q, 0)),   # additive mask bias
        full((D, 3 * D)), full((1, 3 * D)),                 # wqkv, bqkv
        full((D, D)), full((1, D)),                         # wo, bo
        full((1, D)), full((1, D)),                         # ln1 gamma, beta
        full((D, F)), full((1, F)),                         # w1, b1
        full((F, D)), full((1, D)),                         # w2, b2
        full((1, D)), full((1, D)),                         # ln2 gamma, beta
    ]
    scratch_shapes = [
        pltpu.VMEM((nqt, TQ, D), bf16),    # Q, tiled
        pltpu.VMEM((H, S, dh), bf16),      # K, head-major
        pltpu.VMEM((H, S, dh), bf16),      # V, head-major
        pltpu.VMEM((H, TQ, dh), bf16),     # per-tile Q, head-major
        pltpu.VMEM((TQ, D), bf16),         # per-tile attention output (merged)
    ]

    out = pl.pallas_call(
        kernel,
        out_shape=jax.ShapeDtypeStruct((B, S, D), jnp.float32),
        grid_spec=pltpu.PrefetchScalarGridSpec(
            num_scalar_prefetch=0,
            grid=(B, nqt),
            in_specs=in_specs,
            out_specs=pl.BlockSpec((1, TQ, D), lambda b, q: (b, q, 0)),
            scratch_shapes=scratch_shapes,
        ),
        compiler_params=pltpu.CompilerParams(
            dimension_semantics=("parallel", "arbitrary"),
            vmem_limit_bytes=_vmem_limit_bytes(S, D, F, TQ, H),
        ),
    )(x, x, attn_bias,
      wqkv, bqkv, wo, params["bo"],
      params["ln1_g"], params["ln1_b"],
      w1, params["b1"], w2, params["b2"],
      params["ln2_g"], params["ln2_b"])
    return out


def encoder_block_ref(x, mask, params, num_heads):
    """Pure-JAX f32 reference (mirrors the PyTorch forward, dropout = identity)."""
    B, S, D = x.shape
    dh = D // num_heads
    scale = 1.0 / math.sqrt(dh)

    q = x @ params["wq"] + params["bq"][0]
    k = x @ params["wk"] + params["bk"][0]
    v = x @ params["wv"] + params["bv"][0]
    qh = q.reshape(B, S, num_heads, dh).transpose(0, 2, 1, 3)
    kh = k.reshape(B, S, num_heads, dh).transpose(0, 2, 1, 3)
    vh = v.reshape(B, S, num_heads, dh).transpose(0, 2, 1, 3)
    s = jnp.einsum("bhqd,bhkd->bhqk", qh, kh) * scale
    s = jnp.where(mask[:, None, :, :] == 0, -1e9, s)
    p = jax.nn.softmax(s, axis=-1)
    attn = jnp.einsum("bhqk,bhkd->bhqd", p, vh).transpose(0, 2, 1, 3).reshape(B, S, D)
    attn = attn @ params["wo"] + params["bo"][0]

    def ln(z, g, b):
        mu = jnp.mean(z, -1, keepdims=True)
        var = jnp.mean((z - mu) ** 2, -1, keepdims=True)
        return (z - mu) / jnp.sqrt(var + 1e-5) * g[0] + b[0]

    h1 = ln(x + attn, params["ln1_g"], params["ln1_b"])
    ff = jnp.maximum(h1 @ params["w1"] + params["b1"][0], 0.0) @ params["w2"] + params["b2"][0]
    return ln(h1 + ff, params["ln2_g"], params["ln2_b"])


def init_params(key, d_model, d_ff):
    ks = jax.random.split(key, 8)
    sd = 0.02
    return {
        "wq": sd * jax.random.normal(ks[0], (d_model, d_model), jnp.float32),
        "wk": sd * jax.random.normal(ks[1], (d_model, d_model), jnp.float32),
        "wv": sd * jax.random.normal(ks[2], (d_model, d_model), jnp.float32),
        "wo": sd * jax.random.normal(ks[3], (d_model, d_model), jnp.float32),
        "bq": jnp.zeros((1, d_model), jnp.float32),
        "bk": jnp.zeros((1, d_model), jnp.float32),
        "bv": jnp.zeros((1, d_model), jnp.float32),
        "bo": jnp.zeros((1, d_model), jnp.float32),
        "ln1_g": jnp.ones((1, d_model), jnp.float32),
        "ln1_b": jnp.zeros((1, d_model), jnp.float32),
        "w1": sd * jax.random.normal(ks[4], (d_model, d_ff), jnp.float32),
        "b1": 0.01 * jnp.ones((1, d_ff), jnp.float32),
        "w2": sd * jax.random.normal(ks[5], (d_ff, d_model), jnp.float32),
        "b2": 0.01 * jnp.ones((1, d_model), jnp.float32),
        "ln2_g": jnp.ones((1, d_model), jnp.float32),
        "ln2_b": jnp.zeros((1, d_model), jnp.float32),
    }


if __name__ == "__main__":
    # Small, forward-consistent shapes: d_embed == d_model (required by the
    # residual + LayerNorm(d_model) in the reference module).
    B, S, d_model, d_ff, num_heads = 2, 8, 32, 64, 4

    key = jax.random.PRNGKey(0)
    kx, kp = jax.random.split(key)
    x = jax.random.normal(kx, (B, S, d_model), jnp.float32)

    # mask: (B, S, S); 1 = attend, 0 = masked. Mask the last key position of batch 1.
    mask = jnp.ones((B, S, S), jnp.float32)
    mask = mask.at[1, :, -1].set(0.0)

    params = init_params(kp, d_model, d_ff)

    out = encoder_block(x, mask, params, num_heads)
    out = jax.block_until_ready(out)

    ref = encoder_block_ref(x, mask, params, num_heads)
    assert out.shape == (B, S, d_model)
    # bf16 matmul operands (f32 accumulation) -> compare at bf16-level tolerance.
    assert jnp.allclose(out, ref, atol=5e-3, rtol=5e-3), "mismatch vs JAX reference"

    print("KERNEL_OK")
</pallas_src>

<mosaic_0001>
module attributes {stable_mosaic.version = 11 : i64} {
  func.func @kernel(%arg0: i32, %arg1: i32, %arg2: memref<1x8x32xf32, #tpu.memory_space<vmem>>, %arg3: memref<1x8x32xf32, #tpu.memory_space<vmem>>, %arg4: memref<1x8x8xbf16, #tpu.memory_space<vmem>>, %arg5: memref<32x96xbf16, #tpu.memory_space<vmem>>, %arg6: memref<1x96xf32, #tpu.memory_space<vmem>>, %arg7: memref<32x32xbf16, #tpu.memory_space<vmem>>, %arg8: memref<1x32xf32, #tpu.memory_space<vmem>>, %arg9: memref<1x32xf32, #tpu.memory_space<vmem>>, %arg10: memref<1x32xf32, #tpu.memory_space<vmem>>, %arg11: memref<32x64xbf16, #tpu.memory_space<vmem>>, %arg12: memref<1x64xf32, #tpu.memory_space<vmem>>, %arg13: memref<64x32xbf16, #tpu.memory_space<vmem>>, %arg14: memref<1x32xf32, #tpu.memory_space<vmem>>, %arg15: memref<1x32xf32, #tpu.memory_space<vmem>>, %arg16: memref<1x32xf32, #tpu.memory_space<vmem>>, %arg17: memref<1x8x32xf32, #tpu.memory_space<vmem>>, %arg18: memref<1x8x32xbf16, #tpu.memory_space<vmem>>, %arg19: memref<4x8x8xbf16, #tpu.memory_space<vmem>>, %arg20: memref<4x8x8xbf16, #tpu.memory_space<vmem>>, %arg21: memref<4x8x8xbf16, #tpu.memory_space<vmem>>, %arg22: memref<8x32xbf16, #tpu.memory_space<vmem>>) attributes {dimension_semantics = [#tpu.dimension_semantics<parallel>, #tpu.dimension_semantics<arbitrary>], iteration_bounds = array<i64: 2, 1>, scalar_prefetch = 0 : i64, scratch_operands = 5 : i64, tpu.core_type = #tpu.core_type<tc>, window_params = [{transform_indices = @transform_0, window_bounds = array<i64: 1, 8, 32>}, {transform_indices = @transform_1, window_bounds = array<i64: 1, 8, 32>}, {transform_indices = @transform_2, window_bounds = array<i64: 1, 8, 8>}, {pipeline_mode = #tpu.pipeline_mode<synchronous>, transform_indices = @transform_3, window_bounds = array<i64: 32, 96>}, {pipeline_mode = #tpu.pipeline_mode<synchronous>, transform_indices = @transform_4, window_bounds = array<i64: 1, 96>}, {pipeline_mode = #tpu.pipeline_mode<synchronous>, transform_indices = @transform_5, window_bounds = array<i64: 32, 32>}, {pipeline_mode = #tpu.pipeline_mode<synchronous>, transform_indices = @transform_6, window_bounds = array<i64: 1, 32>}, {pipeline_mode = #tpu.pipeline_mode<synchronous>, transform_indices = @transform_7, window_bounds = array<i64: 1, 32>}, {pipeline_mode = #tpu.pipeline_mode<synchronous>, transform_indices = @transform_8, window_bounds = array<i64: 1, 32>}, {pipeline_mode = #tpu.pipeline_mode<synchronous>, transform_indices = @transform_9, window_bounds = array<i64: 32, 64>}, {pipeline_mode = #tpu.pipeline_mode<synchronous>, transform_indices = @transform_10, window_bounds = array<i64: 1, 64>}, {pipeline_mode = #tpu.pipeline_mode<synchronous>, transform_indices = @transform_11, window_bounds = array<i64: 64, 32>}, {pipeline_mode = #tpu.pipeline_mode<synchronous>, transform_indices = @transform_12, window_bounds = array<i64: 1, 32>}, {pipeline_mode = #tpu.pipeline_mode<synchronous>, transform_indices = @transform_13, window_bounds = array<i64: 1, 32>}, {pipeline_mode = #tpu.pipeline_mode<synchronous>, transform_indices = @transform_14, window_bounds = array<i64: 1, 32>}, {transform_indices = @transform_15, window_bounds = array<i64: 1, 8, 32>}]} {
    %c0_i32 = arith.constant 0 : i32
    %0 = arith.cmpi eq, %arg1, %c0_i32 : i32
    %1 = arith.extui %0 : i1 to i32
    %c0_i32_0 = arith.constant 0 : i32
    %2 = arith.cmpi ne, %1, %c0_i32_0 : i32
    scf.if %2 {
      %c0_74 = arith.constant 0 : index
      %c0_75 = arith.constant 0 : index
      %c0_76 = arith.constant 0 : index
      %155 = vector.load %arg2[%c0_74, %c0_75, %c0_76] : memref<1x8x32xf32, #tpu.memory_space<vmem>>, vector<1x8x32xf32>
      %156 = vector.shape_cast %155 : vector<1x8x32xf32> to vector<8x32xf32>
      %157 = arith.truncf %156 : vector<8x32xf32> to vector<8x32xbf16>
      %c0_77 = arith.constant 0 : index
      %c0_78 = arith.constant 0 : index
      %158 = vector.load %arg5[%c0_77, %c0_78] : memref<32x96xbf16, #tpu.memory_space<vmem>>, vector<32x96xbf16>
      %cst_79 = arith.constant dense<0.000000e+00> : vector<8x96xf32>
      %159 = tpu.matmul %157, %158, %cst_79 {dimension_numbers = #tpu.dot_dimension_numbers<[1], [0], [0], [1], [0, 0, 1, 1], [], []>} : vector<8x32xbf16>, vector<32x96xbf16>, vector<8x96xf32> -> vector<8x96xf32>
      %c0_80 = arith.constant 0 : index
      %c0_81 = arith.constant 0 : index
      %160 = vector.load %arg6[%c0_80, %c0_81] : memref<1x96xf32, #tpu.memory_space<vmem>>, vector<1x96xf32>
      %161 = vector.shape_cast %160 : vector<1x96xf32> to vector<96xf32>
      %162 = vector.shape_cast %161 : vector<96xf32> to vector<1x96xf32>
      %163 = vector.broadcast %162 : vector<1x96xf32> to vector<8x96xf32>
      %164 = arith.addf %159, %163 : vector<8x96xf32>
      %165 = arith.truncf %164 : vector<8x96xf32> to vector<8x96xbf16>
      %166 = vector.extract_strided_slice %165 {offsets = [0, 0], sizes = [8, 32], strides = [1, 1]} : vector<8x96xbf16> to vector<8x32xbf16>
      %c0_82 = arith.constant 0 : index
      %c0_83 = arith.constant 0 : index
      %c0_84 = arith.constant 0 : index
      %167 = vector.load %arg18[%c0_82, %c0_83, %c0_84] : memref<1x8x32xbf16, #tpu.memory_space<vmem>>, vector<1x8x32xbf16>
      %168 = vector.shape_cast %167 : vector<1x8x32xbf16> to vector<8x32xbf16>
      %169 = vector.shape_cast %166 : vector<8x32xbf16> to vector<1x8x32xbf16>
      tpu.vector_store %arg18[%c0_82, %c0_83, %c0_84], %169 {strides = array<i32>} : memref<1x8x32xbf16, #tpu.memory_space<vmem>>, vector<1x8x32xbf16>,
      %170 = vector.extract_strided_slice %165 {offsets = [0, 32], sizes = [8, 8], strides = [1, 1]} : vector<8x96xbf16> to vector<8x8xbf16>
      %c0_85 = arith.constant 0 : index
      %c0_86 = arith.constant 0 : index
      %c0_87 = arith.constant 0 : index
      %171 = vector.load %arg19[%c0_85, %c0_86, %c0_87] : memref<4x8x8xbf16, #tpu.memory_space<vmem>>, vector<1x8x8xbf16>
      %172 = vector.shape_cast %171 : vector<1x8x8xbf16> to vector<8x8xbf16>
      %173 = vector.shape_cast %170 : vector<8x8xbf16> to vector<1x8x8xbf16>
      tpu.vector_store %arg19[%c0_85, %c0_86, %c0_87], %173 {strides = array<i32>} : memref<4x8x8xbf16, #tpu.memory_space<vmem>>, vector<1x8x8xbf16>,
      %174 = vector.extract_strided_slice %165 {offsets = [0, 64], sizes = [8, 8], strides = [1, 1]} : vector<8x96xbf16> to vector<8x8xbf16>
      %c0_88 = arith.constant 0 : index
      %c0_89 = arith.constant 0 : index
      %c0_90 = arith.constant 0 : index
      %175 = vector.load %arg20[%c0_88, %c0_89, %c0_90] : memref<4x8x8xbf16, #tpu.memory_space<vmem>>, vector<1x8x8xbf16>
      %176 = vector.shape_cast %175 : vector<1x8x8xbf16> to vector<8x8xbf16>
      %177 = vector.shape_cast %174 : vector<8x8xbf16> to vector<1x8x8xbf16>
      tpu.vector_store %arg20[%c0_88, %c0_89, %c0_90], %177 {strides = array<i32>} : memref<4x8x8xbf16, #tpu.memory_space<vmem>>, vector<1x8x8xbf16>,
      %178 = vector.extract_strided_slice %165 {offsets = [0, 40], sizes = [8, 8], strides = [1, 1]} : vector<8x96xbf16> to vector<8x8xbf16>
      %c1_91 = arith.constant 1 : index
      %c0_92 = arith.constant 0 : index
      %c0_93 = arith.constant 0 : index
      %179 = vector.load %arg19[%c1_91, %c0_92, %c0_93] : memref<4x8x8xbf16, #tpu.memory_space<vmem>>, vector<1x8x8xbf16>
      %180 = vector.shape_cast %179 : vector<1x8x8xbf16> to vector<8x8xbf16>
      %181 = vector.shape_cast %178 : vector<8x8xbf16> to vector<1x8x8xbf16>
      tpu.vector_store %arg19[%c1_91, %c0_92, %c0_93], %181 {strides = array<i32>} : memref<4x8x8xbf16, #tpu.memory_space<vmem>>, vector<1x8x8xbf16>,
      %182 = vector.extract_strided_slice %165 {offsets = [0, 72], sizes = [8, 8], strides = [1, 1]} : vector<8x96xbf16> to vector<8x8xbf16>
      %c1_94 = arith.constant 1 : index
      %c0_95 = arith.constant 0 : index
      %c0_96 = arith.constant 0 : index
      %183 = vector.load %arg20[%c1_94, %c0_95, %c0_96] : memref<4x8x8xbf16, #tpu.memory_space<vmem>>, vector<1x8x8xbf16>
      %184 = vector.shape_cast %183 : vector<1x8x8xbf16> to vector<8x8xbf16>
      %185 = vector.shape_cast %182 : vector<8x8xbf16> to vector<1x8x8xbf16>
      tpu.vector_store %arg20[%c1_94, %c0_95, %c0_96], %185 {strides = array<i32>} : memref<4x8x8xbf16, #tpu.memory_space<vmem>>, vector<1x8x8xbf16>,
      %186 = vector.extract_strided_slice %165 {offsets = [0, 48], sizes = [8, 8], strides = [1, 1]} : vector<8x96xbf16> to vector<8x8xbf16>
      %c2_97 = arith.constant 2 : index
      %c0_98 = arith.constant 0 : index
      %c0_99 = arith.constant 0 : index
      %187 = vector.load %arg19[%c2_97, %c0_98, %c0_99] : memref<4x8x8xbf16, #tpu.memory_space<vmem>>, vector<1x8x8xbf16>
      %188 = vector.shape_cast %187 : vector<1x8x8xbf16> to vector<8x8xbf16>
      %189 = vector.shape_cast %186 : vector<8x8xbf16> to vector<1x8x8xbf16>
      tpu.vector_store %arg19[%c2_97, %c0_98, %c0_99], %189 {strides = array<i32>} : memref<4x8x8xbf16, #tpu.memory_space<vmem>>, vector<1x8x8xbf16>,
      %190 = vector.extract_strided_slice %165 {offsets = [0, 80], sizes = [8, 8], strides = [1, 1]} : vector<8x96xbf16> to vector<8x8xbf16>
      %c2_100 = arith.constant 2 : index
      %c0_101 = arith.constant 0 : index
      %c0_102 = arith.constant 0 : index
      %191 = vector.load %arg20[%c2_100, %c0_101, %c0_102] : memref<4x8x8xbf16, #tpu.memory_space<vmem>>, vector<1x8x8xbf16>
      %192 = vector.shape_cast %191 : vector<1x8x8xbf16> to vector<8x8xbf16>
      %193 = vector.shape_cast %190 : vector<8x8xbf16> to vector<1x8x8xbf16>
      tpu.vector_store %arg20[%c2_100, %c0_101, %c0_102], %193 {strides = array<i32>} : memref<4x8x8xbf16, #tpu.memory_space<vmem>>, vector<1x8x8xbf16>,
      %194 = vector.extract_strided_slice %165 {offsets = [0, 56], sizes = [8, 8], strides = [1, 1]} : vector<8x96xbf16> to vector<8x8xbf16>
      %c3_103 = arith.constant 3 : index
      %c0_104 = arith.constant 0 : index
      %c0_105 = arith.constant 0 : index
      %195 = vector.load %arg19[%c3_103, %c0_104, %c0_105] : memref<4x8x8xbf16, #tpu.memory_space<vmem>>, vector<1x8x8xbf16>
      %196 = vector.shape_cast %195 : vector<1x8x8xbf16> to vector<8x8xbf16>
      %197 = vector.shape_cast %194 : vector<8x8xbf16> to vector<1x8x8xbf16>
      tpu.vector_store %arg19[%c3_103, %c0_104, %c0_105], %197 {strides = array<i32>} : memref<4x8x8xbf16, #tpu.memory_space<vmem>>, vector<1x8x8xbf16>,
      %198 = vector.extract_strided_slice %165 {offsets = [0, 88], sizes = [8, 8], strides = [1, 1]} : vector<8x96xbf16> to vector<8x8xbf16>
      %c3_106 = arith.constant 3 : index
      %c0_107 = arith.constant 0 : index
      %c0_108 = arith.constant 0 : index
      %199 = vector.load %arg20[%c3_106, %c0_107, %c0_108] : memref<4x8x8xbf16, #tpu.memory_space<vmem>>, vector<1x8x8xbf16>
      %200 = vector.shape_cast %199 : vector<1x8x8xbf16> to vector<8x8xbf16>
      %201 = vector.shape_cast %198 : vector<8x8xbf16> to vector<1x8x8xbf16>
      tpu.vector_store %arg20[%c3_106, %c0_107, %c0_108], %201 {strides = array<i32>} : memref<4x8x8xbf16, #tpu.memory_space<vmem>>, vector<1x8x8xbf16>,
    } else {
    }
    %3 = arith.index_cast %arg1 : i32 to index
    %c0 = arith.constant 0 : index
    %c0_1 = arith.constant 0 : index
    %4 = vector.load %arg18[%3, %c0, %c0_1] : memref<1x8x32xbf16, #tpu.memory_space<vmem>>, vector<1x8x32xbf16>
    %5 = vector.shape_cast %4 : vector<1x8x32xbf16> to vector<8x32xbf16>
    %6 = vector.extract_strided_slice %5 {offsets = [0, 0], sizes = [8, 8], strides = [1, 1]} : vector<8x32xbf16> to vector<8x8xbf16>
    %c0_2 = arith.constant 0 : index
    %c0_3 = arith.constant 0 : index
    %c0_4 = arith.constant 0 : index
    %7 = vector.load %arg21[%c0_2, %c0_3, %c0_4] : memref<4x8x8xbf16, #tpu.memory_space<vmem>>, vector<1x8x8xbf16>
    %8 = vector.shape_cast %7 : vector<1x8x8xbf16> to vector<8x8xbf16>
    %9 = vector.shape_cast %6 : vector<8x8xbf16> to vector<1x8x8xbf16>
    tpu.vector_store %arg21[%c0_2, %c0_3, %c0_4], %9 {strides = array<i32>} : memref<4x8x8xbf16, #tpu.memory_space<vmem>>, vector<1x8x8xbf16>,
    %10 = vector.extract_strided_slice %5 {offsets = [0, 8], sizes = [8, 8], strides = [1, 1]} : vector<8x32xbf16> to vector<8x8xbf16>
    %c1 = arith.constant 1 : index
    %c0_5 = arith.constant 0 : index
    %c0_6 = arith.constant 0 : index
    %11 = vector.load %arg21[%c1, %c0_5, %c0_6] : memref<4x8x8xbf16, #tpu.memory_space<vmem>>, vector<1x8x8xbf16>
    %12 = vector.shape_cast %11 : vector<1x8x8xbf16> to vector<8x8xbf16>
    %13 = vector.shape_cast %10 : vector<8x8xbf16> to vector<1x8x8xbf16>
    tpu.vector_store %arg21[%c1, %c0_5, %c0_6], %13 {strides = array<i32>} : memref<4x8x8xbf16, #tpu.memory_space<vmem>>, vector<1x8x8xbf16>,
    %14 = vector.extract_strided_slice %5 {offsets = [0, 16], sizes = [8, 8], strides = [1, 1]} : vector<8x32xbf16> to vector<8x8xbf16>
    %c2 = arith.constant 2 : index
    %c0_7 = arith.constant 0 : index
    %c0_8 = arith.constant 0 : index
    %15 = vector.load %arg21[%c2, %c0_7, %c0_8] : memref<4x8x8xbf16, #tpu.memory_space<vmem>>, vector<1x8x8xbf16>
    %16 = vector.shape_cast %15 : vector<1x8x8xbf16> to vector<8x8xbf16>
    %17 = vector.shape_cast %14 : vector<8x8xbf16> to vector<1x8x8xbf16>
    tpu.vector_store %arg21[%c2, %c0_7, %c0_8], %17 {strides = array<i32>} : memref<4x8x8xbf16, #tpu.memory_space<vmem>>, vector<1x8x8xbf16>,
    %18 = vector.extract_strided_slice %5 {offsets = [0, 24], sizes = [8, 8], strides = [1, 1]} : vector<8x32xbf16> to vector<8x8xbf16>
    %c3 = arith.constant 3 : index
    %c0_9 = arith.constant 0 : index
    %c0_10 = arith.constant 0 : index
    %19 = vector.load %arg21[%c3, %c0_9, %c0_10] : memref<4x8x8xbf16, #tpu.memory_space<vmem>>, vector<1x8x8xbf16>
    %20 = vector.shape_cast %19 : vector<1x8x8xbf16> to vector<8x8xbf16>
    %21 = vector.shape_cast %18 : vector<8x8xbf16> to vector<1x8x8xbf16>
    tpu.vector_store %arg21[%c3, %c0_9, %c0_10], %21 {strides = array<i32>} : memref<4x8x8xbf16, #tpu.memory_space<vmem>>, vector<1x8x8xbf16>,
    %c0_11 = arith.constant 0 : index
    %c0_12 = arith.constant 0 : index
    %c0_13 = arith.constant 0 : index
    %22 = vector.load %arg21[%c0_11, %c0_12, %c0_13] : memref<4x8x8xbf16, #tpu.memory_space<vmem>>, vector<4x8x8xbf16>
    %c0_14 = arith.constant 0 : index
    %c0_15 = arith.constant 0 : index
    %c0_16 = arith.constant 0 : index
    %23 = vector.load %arg19[%c0_14, %c0_15, %c0_16] : memref<4x8x8xbf16, #tpu.memory_space<vmem>>, vector<4x8x8xbf16>
    %c0_17 = arith.constant 0 : index
    %c0_18 = arith.constant 0 : index
    %c0_19 = arith.constant 0 : index
    %24 = vector.load %arg20[%c0_17, %c0_18, %c0_19] : memref<4x8x8xbf16, #tpu.memory_space<vmem>>, vector<4x8x8xbf16>
    "tpu.trace_start"() <{level = 10 : i32, message = "hqd,hkd->hqk"}> : () -> ()
    %cst = arith.constant dense<0.000000e+00> : vector<4x8x8xf32>
    %25 = tpu.matmul %22, %23, %cst {dimension_numbers = #tpu.dot_dimension_numbers<[2], [2], [1], [1], [0, 0, 0, 1, 1, 1], [0], [0]>} : vector<4x8x8xbf16>, vector<4x8x8xbf16>, vector<4x8x8xf32> -> vector<4x8x8xf32>
    "tpu.trace_stop"() : () -> ()
    %cst_20 = arith.constant 0.353553385 : f32
    %26 = vector.broadcast %cst_20 : f32 to vector<4x8x8xf32>
    %27 = arith.mulf %25, %26 : vector<4x8x8xf32>
    %c0_21 = arith.constant 0 : index
    %c0_22 = arith.constant 0 : index
    %c0_23 = arith.constant 0 : index
    %28 = vector.load %arg4[%c0_21, %c0_22, %c0_23] : memref<1x8x8xbf16, #tpu.memory_space<vmem>>, vector<1x8x8xbf16>
    %29 = vector.shape_cast %28 : vector<1x8x8xbf16> to vector<8x8xbf16>
    %30 = arith.extf %29 : vector<8x8xbf16> to vector<8x8xf32>
    %31 = vector.shape_cast %30 : vector<8x8xf32> to vector<1x8x8xf32>
    %32 = vector.broadcast %31 : vector<1x8x8xf32> to vector<4x8x8xf32>
    %33 = arith.addf %27, %32 : vector<4x8x8xf32>
    %cst_24 = arith.constant dense<0xFF800000> : vector<4x8xf32>
    %34 = vector.multi_reduction <maximumf>, %33, %cst_24 [2] : vector<4x8x8xf32> to vector<4x8xf32>
    %35 = vector.shape_cast %34 : vector<4x8xf32> to vector<4x8x1xf32>
    %36 = vector.broadcast %35 : vector<4x8x1xf32> to vector<4x8x8xf32>
    %37 = arith.subf %33, %36 : vector<4x8x8xf32>
    %38 = math.exp %37 : vector<4x8x8xf32>
    %cst_25 = arith.constant dense<0.000000e+00> : vector<4x8xf32>
    %39 = vector.multi_reduction <add>, %38, %cst_25 [2] : vector<4x8x8xf32> to vector<4x8xf32>
    %40 = vector.shape_cast %39 : vector<4x8xf32> to vector<4x8x1xf32>
    %41 = arith.truncf %38 : vector<4x8x8xf32> to vector<4x8x8xbf16>
    "tpu.trace_start"() <{level = 10 : i32, message = "hqk,hkd->hqd"}> : () -> ()
    %cst_26 = arith.constant dense<0.000000e+00> : vector<4x8x8xf32>
    %42 = tpu.matmul %41, %24, %cst_26 {dimension_numbers = #tpu.dot_dimension_numbers<[2], [1], [1], [2], [0, 0, 0, 1, 1, 2], [0], [0]>} : vector<4x8x8xbf16>, vector<4x8x8xbf16>, vector<4x8x8xf32> -> vector<4x8x8xf32>
    "tpu.trace_stop"() : () -> ()
    %43 = tpu.reciprocal %40 {approx = true} : vector<4x8x1xf32> -> vector<4x8x1xf32>
    %44 = vector.broadcast %43 : vector<4x8x1xf32> to vector<4x8x8xf32>
    %45 = arith.mulf %42, %44 : vector<4x8x8xf32>
    %46 = vector.extract_strided_slice %45 {offsets = [0, 0, 0], sizes = [1, 8, 8], strides = [1, 1, 1]} : vector<4x8x8xf32> to vector<1x8x8xf32>
    %47 = vector.shape_cast %46 : vector<1x8x8xf32> to vector<8x8xf32>
    %48 = arith.truncf %47 : vector<8x8xf32> to vector<8x8xbf16>
    %c0_27 = arith.constant 0 : index
    %c0_28 = arith.constant 0 : index
    %49 = vector.load %arg22[%c0_27, %c0_28] : memref<8x32xbf16, #tpu.memory_space<vmem>>, vector<8x8xbf16>
    tpu.vector_store %arg22[%c0_27, %c0_28], %48 {strides = array<i32>} : memref<8x32xbf16, #tpu.memory_space<vmem>>, vector<8x8xbf16>,
    %50 = vector.extract_strided_slice %45 {offsets = [1, 0, 0], sizes = [1, 8, 8], strides = [1, 1, 1]} : vector<4x8x8xf32> to vector<1x8x8xf32>
    %51 = vector.shape_cast %50 : vector<1x8x8xf32> to vector<8x8xf32>
    %52 = arith.truncf %51 : vector<8x8xf32> to vector<8x8xbf16>
    %c0_29 = arith.constant 0 : index
    %c8 = arith.constant 8 : index
    %53 = vector.load %arg22[%c0_29, %c8] : memref<8x32xbf16, #tpu.memory_space<vmem>>, vector<8x8xbf16>
    tpu.vector_store %arg22[%c0_29, %c8], %52 {strides = array<i32>} : memref<8x32xbf16, #tpu.memory_space<vmem>>, vector<8x8xbf16>,
    %54 = vector.extract_strided_slice %45 {offsets = [2, 0, 0], sizes = [1, 8, 8], strides = [1, 1, 1]} : vector<4x8x8xf32> to vector<1x8x8xf32>
    %55 = vector.shape_cast %54 : vector<1x8x8xf32> to vector<8x8xf32>
    %56 = arith.truncf %55 : vector<8x8xf32> to vector<8x8xbf16>
    %c0_30 = arith.constant 0 : index
    %c16 = arith.constant 16 : index
    %57 = vector.load %arg22[%c0_30, %c16] : memref<8x32xbf16, #tpu.memory_space<vmem>>, vector<8x8xbf16>
    tpu.vector_store %arg22[%c0_30, %c16], %56 {strides = array<i32>} : memref<8x32xbf16, #tpu.memory_space<vmem>>, vector<8x8xbf16>,
    %58 = vector.extract_strided_slice %45 {offsets = [3, 0, 0], sizes = [1, 8, 8], strides = [1, 1, 1]} : vector<4x8x8xf32> to vector<1x8x8xf32>
    %59 = vector.shape_cast %58 : vector<1x8x8xf32> to vector<8x8xf32>
    %60 = arith.truncf %59 : vector<8x8xf32> to vector<8x8xbf16>
    %c0_31 = arith.constant 0 : index
    %c24 = arith.constant 24 : index
    %61 = vector.load %arg22[%c0_31, %c24] : memref<8x32xbf16, #tpu.memory_space<vmem>>, vector<8x8xbf16>
    tpu.vector_store %arg22[%c0_31, %c24], %60 {strides = array<i32>} : memref<8x32xbf16, #tpu.memory_space<vmem>>, vector<8x8xbf16>,
    %c0_32 = arith.constant 0 : index
    %c0_33 = arith.constant 0 : index
    %62 = vector.load %arg22[%c0_32, %c0_33] : memref<8x32xbf16, #tpu.memory_space<vmem>>, vector<8x32xbf16>
    %c0_34 = arith.constant 0 : index
    %c0_35 = arith.constant 0 : index
    %63 = vector.load %arg7[%c0_34, %c0_35] : memref<32x32xbf16, #tpu.memory_space<vmem>>, vector<32x32xbf16>
    %cst_36 = arith.constant dense<0.000000e+00> : vector<8x32xf32>
    %64 = tpu.matmul %62, %63, %cst_36 {dimension_numbers = #tpu.dot_dimension_numbers<[1], [0], [0], [1], [0, 0, 1, 1], [], []>} : vector<8x32xbf16>, vector<32x32xbf16>, vector<8x32xf32> -> vector<8x32xf32>
    %c0_37 = arith.constant 0 : index
    %c0_38 = arith.constant 0 : index
    %65 = vector.load %arg8[%c0_37, %c0_38] : memref<1x32xf32, #tpu.memory_space<vmem>>, vector<1x32xf32>
    %66 = vector.shape_cast %65 : vector<1x32xf32> to vector<32xf32>
    %67 = vector.shape_cast %66 : vector<32xf32> to vector<1x32xf32>
    %68 = vector.broadcast %67 : vector<1x32xf32> to vector<8x32xf32>
    %69 = arith.addf %64, %68 : vector<8x32xf32>
    %c0_39 = arith.constant 0 : index
    %c0_40 = arith.constant 0 : index
    %c0_41 = arith.constant 0 : index
    %70 = vector.load %arg3[%c0_39, %c0_40, %c0_41] : memref<1x8x32xf32, #tpu.memory_space<vmem>>, vector<1x8x32xf32>
    %71 = vector.shape_cast %70 : vector<1x8x32xf32> to vector<8x32xf32>
    %72 = arith.addf %71, %69 : vector<8x32xf32>
    %c0_42 = arith.constant 0 : index
    %c0_43 = arith.constant 0 : index
    %73 = vector.load %arg9[%c0_42, %c0_43] : memref<1x32xf32, #tpu.memory_space<vmem>>, vector<1x32xf32>
    %74 = vector.shape_cast %73 : vector<1x32xf32> to vector<32xf32>
    %c0_44 = arith.constant 0 : index
    %c0_45 = arith.constant 0 : index
    %75 = vector.load %arg10[%c0_44, %c0_45] : memref<1x32xf32, #tpu.memory_space<vmem>>, vector<1x32xf32>
    %76 = vector.shape_cast %75 : vector<1x32xf32> to vector<32xf32>
    %cst_46 = arith.constant dense<0.000000e+00> : vector<8xf32>
    %77 = vector.multi_reduction <add>, %72, %cst_46 [1] : vector<8x32xf32> to vector<8xf32>
    %78 = vector.shape_cast %77 : vector<8xf32> to vector<8x1xf32>
    %cst_47 = arith.constant 3.200000e+01 : f32
    %79 = vector.broadcast %cst_47 : f32 to vector<8x1xf32>
    %80 = arith.divf %78, %79 : vector<8x1xf32>
    %81 = vector.broadcast %80 : vector<8x1xf32> to vector<8x32xf32>
    %82 = arith.subf %72, %81 : vector<8x32xf32>
    %83 = vector.broadcast %80 : vector<8x1xf32> to vector<8x32xf32>
    %84 = arith.subf %72, %83 : vector<8x32xf32>
    %85 = arith.mulf %82, %84 : vector<8x32xf32>
    %cst_48 = arith.constant dense<0.000000e+00> : vector<8xf32>
    %86 = vector.multi_reduction <add>, %85, %cst_48 [1] : vector<8x32xf32> to vector<8xf32>
    %87 = vector.shape_cast %86 : vector<8xf32> to vector<8x1xf32>
    %cst_49 = arith.constant 3.200000e+01 : f32
    %88 = vector.broadcast %cst_49 : f32 to vector<8x1xf32>
    %89 = arith.divf %87, %88 : vector<8x1xf32>
    %90 = vector.broadcast %80 : vector<8x1xf32> to vector<8x32xf32>
    %91 = arith.subf %72, %90 : vector<8x32xf32>
    %cst_50 = arith.constant 9.99999974E-6 : f32
    %92 = vector.broadcast %cst_50 : f32 to vector<8x1xf32>
    %93 = arith.addf %89, %92 : vector<8x1xf32>
    %94 = math.rsqrt %93 : vector<8x1xf32>
    %95 = vector.broadcast %94 : vector<8x1xf32> to vector<8x32xf32>
    %96 = arith.mulf %91, %95 : vector<8x32xf32>
    %97 = vector.shape_cast %74 : vector<32xf32> to vector<1x32xf32>
    %98 = vector.broadcast %97 : vector<1x32xf32> to vector<8x32xf32>
    %99 = arith.mulf %96, %98 : vector<8x32xf32>
    %100 = vector.shape_cast %76 : vector<32xf32> to vector<1x32xf32>
    %101 = vector.broadcast %100 : vector<1x32xf32> to vector<8x32xf32>
    %102 = arith.addf %99, %101 : vector<8x32xf32>
    %103 = arith.truncf %102 : vector<8x32xf32> to vector<8x32xbf16>
    %c0_51 = arith.constant 0 : index
    %c0_52 = arith.constant 0 : index
    %104 = vector.load %arg11[%c0_51, %c0_52] : memref<32x64xbf16, #tpu.memory_space<vmem>>, vector<32x64xbf16>
    %cst_53 = arith.constant dense<0.000000e+00> : vector<8x64xf32>
    %105 = tpu.matmul %103, %104, %cst_53 {dimension_numbers = #tpu.dot_dimension_numbers<[1], [0], [0], [1], [0, 0, 1, 1], [], []>} : vector<8x32xbf16>, vector<32x64xbf16>, vector<8x64xf32> -> vector<8x64xf32>
    %c0_54 = arith.constant 0 : index
    %c0_55 = arith.constant 0 : index
    %106 = vector.load %arg12[%c0_54, %c0_55] : memref<1x64xf32, #tpu.memory_space<vmem>>, vector<1x64xf32>
    %107 = vector.shape_cast %106 : vector<1x64xf32> to vector<64xf32>
    %108 = vector.shape_cast %107 : vector<64xf32> to vector<1x64xf32>
    %109 = vector.broadcast %108 : vector<1x64xf32> to vector<8x64xf32>
    %110 = arith.addf %105, %109 : vector<8x64xf32>
    %cst_56 = arith.constant 0.000000e+00 : f32
    %111 = vector.broadcast %cst_56 : f32 to vector<8x64xf32>
    %112 = arith.maximumf %110, %111 : vector<8x64xf32>
    %113 = arith.truncf %112 : vector<8x64xf32> to vector<8x64xbf16>
    %c0_57 = arith.constant 0 : index
    %c0_58 = arith.constant 0 : index
    %114 = vector.load %arg13[%c0_57, %c0_58] : memref<64x32xbf16, #tpu.memory_space<vmem>>, vector<64x32xbf16>
    %cst_59 = arith.constant dense<0.000000e+00> : vector<8x32xf32>
    %115 = tpu.matmul %113, %114, %cst_59 {dimension_numbers = #tpu.dot_dimension_numbers<[1], [0], [0], [1], [0, 0, 1, 1], [], []>} : vector<8x64xbf16>, vector<64x32xbf16>, vector<8x32xf32> -> vector<8x32xf32>
    %c0_60 = arith.constant 0 : index
    %c0_61 = arith.constant 0 : index
    %116 = vector.load %arg14[%c0_60, %c0_61] : memref<1x32xf32, #tpu.memory_space<vmem>>, vector<1x32xf32>
    %117 = vector.shape_cast %116 : vector<1x32xf32> to vector<32xf32>
    %118 = vector.shape_cast %117 : vector<32xf32> to vector<1x32xf32>
    %119 = vector.broadcast %118 : vector<1x32xf32> to vector<8x32xf32>
    %120 = arith.addf %115, %119 : vector<8x32xf32>
    %121 = arith.addf %102, %120 : vector<8x32xf32>
    %c0_62 = arith.constant 0 : index
    %c0_63 = arith.constant 0 : index
    %122 = vector.load %arg15[%c0_62, %c0_63] : memref<1x32xf32, #tpu.memory_space<vmem>>, vector<1x32xf32>
    %123 = vector.shape_cast %122 : vector<1x32xf32> to vector<32xf32>
    %c0_64 = arith.constant 0 : index
    %c0_65 = arith.constant 0 : index
    %124 = vector.load %arg16[%c0_64, %c0_65] : memref<1x32xf32, #tpu.memory_space<vmem>>, vector<1x32xf32>
    %125 = vector.shape_cast %124 : vector<1x32xf32> to vector<32xf32>
    %cst_66 = arith.constant dense<0.000000e+00> : vector<8xf32>
    %126 = vector.multi_reduction <add>, %121, %cst_66 [1] : vector<8x32xf32> to vector<8xf32>
    %127 = vector.shape_cast %126 : vector<8xf32> to vector<8x1xf32>
    %cst_67 = arith.constant 3.200000e+01 : f32
    %128 = vector.broadcast %cst_67 : f32 to vector<8x1xf32>
    %129 = arith.divf %127, %128 : vector<8x1xf32>
    %130 = vector.broadcast %129 : vector<8x1xf32> to vector<8x32xf32>
    %131 = arith.subf %121, %130 : vector<8x32xf32>
    %132 = vector.broadcast %129 : vector<8x1xf32> to vector<8x32xf32>
    %133 = arith.subf %121, %132 : vector<8x32xf32>
    %134 = arith.mulf %131, %133 : vector<8x32xf32>
    %cst_68 = arith.constant dense<0.000000e+00> : vector<8xf32>
    %135 = vector.multi_reduction <add>, %134, %cst_68 [1] : vector<8x32xf32> to vector<8xf32>
    %136 = vector.shape_cast %135 : vector<8xf32> to vector<8x1xf32>
    %cst_69 = arith.constant 3.200000e+01 : f32
    %137 = vector.broadcast %cst_69 : f32 to vector<8x1xf32>
    %138 = arith.divf %136, %137 : vector<8x1xf32>
    %139 = vector.broadcast %129 : vector<8x1xf32> to vector<8x32xf32>
    %140 = arith.subf %121, %139 : vector<8x32xf32>
    %cst_70 = arith.constant 9.99999974E-6 : f32
    %141 = vector.broadcast %cst_70 : f32 to vector<8x1xf32>
    %142 = arith.addf %138, %141 : vector<8x1xf32>
    %143 = math.rsqrt %142 : vector<8x1xf32>
    %144 = vector.broadcast %143 : vector<8x1xf32> to vector<8x32xf32>
    %145 = arith.mulf %140, %144 : vector<8x32xf32>
    %146 = vector.shape_cast %123 : vector<32xf32> to vector<1x32xf32>
    %147 = vector.broadcast %146 : vector<1x32xf32> to vector<8x32xf32>
    %148 = arith.mulf %145, %147 : vector<8x32xf32>
    %149 = vector.shape_cast %125 : vector<32xf32> to vector<1x32xf32>
    %150 = vector.broadcast %149 : vector<1x32xf32> to vector<8x32xf32>
    %151 = arith.addf %148, %150 : vector<8x32xf32>
    %c0_71 = arith.constant 0 : index
    %c0_72 = arith.constant 0 : index
    %c0_73 = arith.constant 0 : index
    %152 = vector.load %arg17[%c0_71, %c0_72, %c0_73] : memref<1x8x32xf32, #tpu.memory_space<vmem>>, vector<1x8x32xf32>
    %153 = vector.shape_cast %152 : vector<1x8x32xf32> to vector<8x32xf32>
    %154 = vector.shape_cast %151 : vector<8x32xf32> to vector<1x8x32xf32>
    tpu.vector_store %arg17[%c0_71, %c0_72, %c0_73], %154 {strides = array<i32>} : memref<1x8x32xf32, #tpu.memory_space<vmem>>, vector<1x8x32xf32>,
    return
  }
  func.func @transform_0(%arg0: i32, %arg1: i32) -> (i32, i32, i32) {
    %c0_i32 = arith.constant 0 : i32
    %c0_i32_0 = arith.constant 0 : i32
    %c0_i32_1 = arith.constant 0 : i32
    return %arg0, %c0_i32, %c0_i32_0 : i32, i32, i32
  }
  func.func @transform_1(%arg0: i32, %arg1: i32) -> (i32, i32, i32) {
    %c0_i32 = arith.constant 0 : i32
    %c0_i32_0 = arith.constant 0 : i32
    return %arg0, %arg1, %c0_i32 : i32, i32, i32
  }
  func.func @transform_2(%arg0: i32, %arg1: i32) -> (i32, i32, i32) {
    %c0_i32 = arith.constant 0 : i32
    %c0_i32_0 = arith.constant 0 : i32
    return %arg0, %arg1, %c0_i32 : i32, i32, i32
  }
  func.func @transform_3(%arg0: i32, %arg1: i32) -> (i32, i32) {
    %c0_i32 = arith.constant 0 : i32
    %c0_i32_0 = arith.constant 0 : i32
    %c0_i32_1 = arith.constant 0 : i32
    return %c0_i32, %c0_i32_0 : i32, i32
  }
  func.func @transform_4(%arg0: i32, %arg1: i32) -> (i32, i32) {
    %c0_i32 = arith.constant 0 : i32
    %c0_i32_0 = arith.constant 0 : i32
    %c0_i32_1 = arith.constant 0 : i32
    return %c0_i32, %c0_i32_0 : i32, i32
  }
  func.func @transform_5(%arg0: i32, %arg1: i32) -> (i32, i32) {
    %c0_i32 = arith.constant 0 : i32
    %c0_i32_0 = arith.constant 0 : i32
    %c0_i32_1 = arith.constant 0 : i32
    return %c0_i32, %c0_i32_0 : i32, i32
  }
  func.func @transform_6(%arg0: i32, %arg1: i32) -> (i32, i32) {
    %c0_i32 = arith.constant 0 : i32
    %c0_i32_0 = arith.constant 0 : i32
    %c0_i32_1 = arith.constant 0 : i32
    return %c0_i32, %c0_i32_0 : i32, i32
  }
  func.func @transform_7(%arg0: i32, %arg1: i32) -> (i32, i32) {
    %c0_i32 = arith.constant 0 : i32
    %c0_i32_0 = arith.constant 0 : i32
    %c0_i32_1 = arith.constant 0 : i32
    return %c0_i32, %c0_i32_0 : i32, i32
  }
  func.func @transform_8(%arg0: i32, %arg1: i32) -> (i32, i32) {
    %c0_i32 = arith.constant 0 : i32
    %c0_i32_0 = arith.constant 0 : i32
    %c0_i32_1 = arith.constant 0 : i32
    return %c0_i32, %c0_i32_0 : i32, i32
  }
  func.func @transform_9(%arg0: i32, %arg1: i32) -> (i32, i32) {
    %c0_i32 = arith.constant 0 : i32
    %c0_i32_0 = arith.constant 0 : i32
    %c0_i32_1 = arith.constant 0 : i32
    return %c0_i32, %c0_i32_0 : i32, i32
  }
  func.func @transform_10(%arg0: i32, %arg1: i32) -> (i32, i32) {
    %c0_i32 = arith.constant 0 : i32
    %c0_i32_0 = arith.constant 0 : i32
    %c0_i32_1 = arith.constant 0 : i32
    return %c0_i32, %c0_i32_0 : i32, i32
  }
  func.func @transform_11(%arg0: i32, %arg1: i32) -> (i32, i32) {
    %c0_i32 = arith.constant 0 : i32
    %c0_i32_0 = arith.constant 0 : i32
    %c0_i32_1 = arith.constant 0 : i32
    return %c0_i32, %c0_i32_0 : i32, i32
  }
  func.func @transform_12(%arg0: i32, %arg1: i32) -> (i32, i32) {
    %c0_i32 = arith.constant 0 : i32
    %c0_i32_0 = arith.constant 0 : i32
    %c0_i32_1 = arith.constant 0 : i32
    return %c0_i32, %c0_i32_0 : i32, i32
  }
  func.func @transform_13(%arg0: i32, %arg1: i32) -> (i32, i32) {
    %c0_i32 = arith.constant 0 : i32
    %c0_i32_0 = arith.constant 0 : i32
    %c0_i32_1 = arith.constant 0 : i32
    return %c0_i32, %c0_i32_0 : i32, i32
  }
  func.func @transform_14(%arg0: i32, %arg1: i32) -> (i32, i32) {
    %c0_i32 = arith.constant 0 : i32
    %c0_i32_0 = arith.constant 0 : i32
    %c0_i32_1 = arith.constant 0 : i32
    return %c0_i32, %c0_i32_0 : i32, i32
  }
  func.func @transform_15(%arg0: i32, %arg1: i32) -> (i32, i32, i32) {
    %c0_i32 = arith.constant 0 : i32
    %c0_i32_0 = arith.constant 0 : i32
    return %arg0, %arg1, %c0_i32 : i32, i32, i32
  }
}

</mosaic_0001>

<llo_original>
// kernel: tpu_custom_call.1
$region0: #{tpu_custom_call.1}
  #allocation0 [shape = 'u32[]', space=smem, size = 0x4, offset = 0x4, fixed_abs, tag = 'smem constant byte address 0x4 - core index']
  #allocation1 [shape = 'u32[144,128]{1,0:T(1,128)}', space=vmem, size = 0x12000, scoped, tag = 'internal scratch']
  #allocation2 [shape = 'bf16[1,8,32]{2,1,0:T(8,128)(2,1)}', space=vmem, size = 0x800, scoped, tag = 'scratch operand']
  #allocation3 [shape = 'bf16[4,8,8]{2,1,0:T(8,128)(2,1)}', space=vmem, size = 0x2000, scoped, tag = 'scratch operand']
  #allocation4 [shape = 'bf16[4,8,8]{2,1,0:T(8,128)(2,1)}', space=vmem, size = 0x2000, scoped, tag = 'scratch operand']
  #allocation5 [shape = 'bf16[4,8,8]{2,1,0:T(8,128)(2,1)}', space=vmem, size = 0x2000, scoped, tag = 'scratch operand']
  #allocation6 [shape = 'bf16[8,32]{1,0:T(8,128)(2,1)}', space=vmem, size = 0x800, scoped, tag = 'scratch operand']
  %s0 = inlined_call_operand.vmem [shape: f32[2,8,32], index: 0, kind: input, shape index: {}]
  %s1 = inlined_call_operand.vmem [shape: f32[2,8,32], index: 1, kind: input, shape index: {}]
  %s2 = inlined_call_operand.hbm [shape: bf16[2,8,8], index: 2, kind: input, shape index: {}]
  %s3 = inlined_call_operand.vmem [shape: bf16[32,96], index: 3, kind: input, shape index: {}]
  %s4 = inlined_call_operand.vmem [shape: f32[1,96], index: 4, kind: input, shape index: {}]
  %s5 = inlined_call_operand.hbm [shape: bf16[32,32], index: 5, kind: input, shape index: {}]
  %s6 = inlined_call_operand.vmem [shape: f32[1,32], index: 6, kind: input, shape index: {}]
  %s7 = inlined_call_operand.vmem [shape: f32[1,32], index: 7, kind: input, shape index: {}]
  %s8 = inlined_call_operand.vmem [shape: f32[1,32], index: 8, kind: input, shape index: {}]
  %s9 = inlined_call_operand.hbm [shape: bf16[32,64], index: 9, kind: input, shape index: {}]
  %s10 = inlined_call_operand.hbm [shape: f32[1,64], index: 10, kind: input, shape index: {}]
  %s11 = inlined_call_operand.vmem [shape: bf16[64,32], index: 11, kind: input, shape index: {}]
  %s12 = inlined_call_operand.vmem [shape: f32[1,32], index: 12, kind: input, shape index: {}]
  %s13 = inlined_call_operand.vmem [shape: f32[1,32], index: 13, kind: input, shape index: {}]
  %s14 = inlined_call_operand.vmem [shape: f32[1,32], index: 14, kind: input, shape index: {}]
  %s15 = inlined_call_operand.hbm [shape: f32[2,8,32], index: 15, kind: output, shape index: {}]
  %s16 = sld [smem:[#allocation0]]
  $region113: #{tpu_custom_call.1} parent=0
    _
  %s18 = ssub.s32 1, %s16
  %s19 = scalar_select 0, %s18, %s16
  $region1: #{tpu_custom_call.1} parent=0
    #allocation7 [shape = 'u8[4096]{0}', space=vmem, size = 0x1000, scoped, tag = 'input window, operand 2']
    #allocation8 [shape = 's32[2]{0}', space=sflag, size = 0x8, scoped, tag = 'scoped memory for tpu_custom_call.1']
    #allocation9 [shape = 's32[2]{0}', space=sflag, size = 0x8, scoped, tag = 'scoped memory for tpu_custom_call.1']
    #allocation10 [shape = 'u8[8192]{0}', space=vmem, size = 0x2000, scoped, tag = 'input window, operand 5, single buffered']
    #allocation11 [shape = 's32[1]{0}', space=sflag, size = 0x4, scoped, tag = 'scoped memory for tpu_custom_call.1']
    #allocation12 [shape = 'u8[8192]{0}', space=vmem, size = 0x2000, scoped, tag = 'input window, operand 9, single buffered']
    #allocation13 [shape = 'u8[512]{0}', space=vmem, size = 0x400, scoped, tag = 'input window, operand 10, single buffered']
    #allocation14 [shape = 's32[1]{0}', space=sflag, size = 0x4, scoped, tag = 'scoped memory for tpu_custom_call.1']
    #allocation15 [shape = 'u8[8192]{0}', space=vmem, size = 0x2000, scoped, tag = 'output window, operand 0']
    %20 = vsyncpa [#allocation8], 0
    %s21 = scalar_lea.sflag [#allocation8], 1
    %22 = vsyncpa %s21, 0
    %23 = vsyncpa [#allocation11], 0
    %24 = vsyncpa [#allocation14], 0
    %25 = vsyncpa [#allocation9], 0
    %s26 = scalar_lea.sflag [#allocation9], 1
    %27 = vsyncpa %s26, 0
    loop: start=0, step=1, limit=4
    $region2: #{tpu_custom_call.1} parent=1 // loop_pre_header
      _
    $region3: #{tpu_custom_call.1} parent=1 // loop_header
      %s29 = sphi 0, %s33
      %p30 = scmp.ge.s32.totalorder %s29, 4
      %s36 = sphi 0, %s48
      %s37 = sphi 0, %s44
      %s38 = sphi 0, %s36
      %s39 = sphi 0, %s37
      %s40 = sphi 0, %s38
      %s41 = sphi 0, %s39
      %s51 = sphi 0, %s53
      %s54 = sphi 0, %s51
      %s55 = sphi 0, %s54
      %s71 = sphi 0, %s55
      %s79 = sphi 0, %s81
      %s82 = sphi 0, %s79
      %s83 = sphi 0, %s82
      %s99 = sphi 0, %s83
      %s107 = sphi 0, %s109
      %s110 = sphi 0, %s107
      %s111 = sphi 0, %s110
      %s127 = sphi 0, %s111
      %s131 = sphi 0, %s131
      %s133 = sphi 0, %s131
      %s134 = sphi 0, %s133
      %s148 = sphi 0, %s134
      %s152 = sphi 0, %s152
      %s154 = sphi 0, %s152
      %s155 = sphi 0, %s154
      %s169 = sphi 0, %s155
      %s173 = sphi 0, %s173
      %s175 = sphi 0, %s173
      %s176 = sphi 0, %s175
      %s190 = sphi 0, %s176
      %s194 = sphi 0, %s194
      %s196 = sphi 0, %s194
      %s197 = sphi 0, %s196
      %s211 = sphi 0, %s197
      %s215 = sphi 0, %s215
      %s217 = sphi 0, %s215
      %s218 = sphi 0, %s217
      %s232 = sphi 0, %s218
      %s236 = sphi 0, %s236
      %s238 = sphi 0, %s236
      %s239 = sphi 0, %s238
      %s253 = sphi 0, %s239
      %s257 = sphi 0, %s257
      %s259 = sphi 0, %s257
      %s260 = sphi 0, %s259
      %s274 = sphi 0, %s260
      %s278 = sphi 0, %s278
      %s280 = sphi 0, %s278
      %s281 = sphi 0, %s280
      %s295 = sphi 0, %s281
      %s299 = sphi 0, %s299
      %s301 = sphi 0, %s299
      %s302 = sphi 0, %s301
      %s316 = sphi 0, %s302
      %s320 = sphi 0, %s320
      %s322 = sphi 0, %s320
      %s323 = sphi 0, %s322
      %s337 = sphi 0, %s323
      %s341 = sphi 0, %s341
      %s343 = sphi 0, %s341
      %s344 = sphi 0, %s343
      %s358 = sphi 0, %s344
      %s362 = sphi 0, %s362
      %s364 = sphi 0, %s362
      %s365 = sphi 0, %s364
      %s379 = sphi 0, %s365
      %s387 = sphi 0, %s389
      %s390 = sphi 0, %s387
      %s391 = sphi 0, %s390
      %s407 = sphi 0, %s391
    $region4: #{tpu_custom_call.1} parent=1 // loop_header_branch
      %32 = sbr.rel (%p30) target = $region8
    $region5: #{tpu_custom_call.1} parent=1 // loop_body
      %s34 = ssub.s32 %s29, 1
      %s35 = ssub.s32 %s29, 2
      %s42 = sadd.s32 1, %s37
      %p43 = scmp.ge.s32.totalorder %s42, 1
      %s44 = scalar_select %p43, 0, %s42
      %s45 = sadd.s32 1, %s36
      %s46 = scalar_select %p43, %s45, %s36
      %p47 = scmp.ge.s32.totalorder %s46, 2
      %s48 = scalar_select %p47, 0, %s46
      %s49 = ssub.s32 %s36, %s48
      %p50 = scmp.eq.s32.totalorder %s49, 0
      %s52 = sadd.s32 %s51, 1
      %s53 = scalar_select %p50, %s51, %s52
      %p56 = pneg %p50
      %p57 = scmp.eq.s32.totalorder %s29, 1
      %p58 = por %p56, %p57
      %p59 = scmp.ne.s32.totalorder %s51, %s54
      %p60 = scmp.eq.s32.totalorder %s29, 0
      %p61 = por %p59, %p60
      %p62 = scmp.ne.s32.totalorder %s51, %s54
      %p63 = scmp.eq.s32.totalorder %s34, 1
      %p64 = por %p62, %p63
      %p65 = scmp.ne.s32.totalorder %s54, %s55
      %p66 = scmp.eq.s32.totalorder %s34, 0
      %p67 = por %p65, %p66
      %p68 = scmp.ne.s32.totalorder %s54, %s55
      %p69 = scmp.eq.s32.totalorder %s35, 1
      %p70 = por %p68, %p69
      %p72 = scmp.ne.s32.totalorder %s55, %s71
      %p73 = scmp.eq.s32.totalorder %s35, 0
      %p74 = por %p72, %p73
      %s75 = ssub.s32 %s36, %s48
      %s76 = ssub.s32 %s37, %s44
      %s77 = sor.u32 %s75, %s76
      %p78 = scmp.eq.s32.totalorder %s77, 0
      %s80 = sadd.s32 %s79, 1
      %s81 = scalar_select %p78, %s79, %s80
      %p84 = pneg %p78
      %p85 = scmp.eq.s32.totalorder %s29, 1
      %p86 = por %p84, %p85
      %p87 = scmp.ne.s32.totalorder %s79, %s82
      %p88 = scmp.eq.s32.totalorder %s29, 0
      %p89 = por %p87, %p88
      %p90 = scmp.ne.s32.totalorder %s79, %s82
      %p91 = scmp.eq.s32.totalorder %s34, 1
      %p92 = por %p90, %p91
      %p93 = scmp.ne.s32.totalorder %s82, %s83
      %p94 = scmp.eq.s32.totalorder %s34, 0
      %p95 = por %p93, %p94
      %p96 = scmp.ne.s32.totalorder %s82, %s83
      %p97 = scmp.eq.s32.totalorder %s35, 1
      %p98 = por %p96, %p97
      %p100 = scmp.ne.s32.totalorder %s83, %s99
      %p101 = scmp.eq.s32.totalorder %s35, 0
      %p102 = por %p100, %p101
      %s103 = ssub.s32 %s36, %s48
      %s104 = ssub.s32 %s37, %s44
      %s105 = sor.u32 %s103, %s104
      %p106 = scmp.eq.s32.totalorder %s105, 0
      %s108 = sadd.s32 %s107, 1
      %s109 = scalar_select %p106, %s107, %s108
      %p112 = pneg %p106
      %p113 = scmp.eq.s32.totalorder %s29, 1
      %p114 = por %p112, %p113
      %p115 = scmp.ne.s32.totalorder %s107, %s110
      %p116 = scmp.eq.s32.totalorder %s29, 0
      %p117 = por %p115, %p116
      %p118 = scmp.ne.s32.totalorder %s107, %s110
      %p119 = scmp.eq.s32.totalorder %s34, 1
      %p120 = por %p118, %p119
      %p121 = scmp.ne.s32.totalorder %s110, %s111
      %p122 = scmp.eq.s32.totalorder %s34, 0
      %p123 = por %p121, %p122
      %p124 = scmp.ne.s32.totalorder %s110, %s111
      %p125 = scmp.eq.s32.totalorder %s35, 1
      %p126 = por %p124, %p125
      %p128 = scmp.ne.s32.totalorder %s111, %s127
      %p129 = scmp.eq.s32.totalorder %s35, 0
      %p130 = por %p128, %p129
      %s132 = sadd.s32 %s131, 1
      %p135 = scmp.eq.s32.totalorder %s29, 1
      %p136 = scmp.ne.s32.totalorder %s131, %s133
      %p137 = scmp.eq.s32.totalorder %s29, 0
      %p138 = por %p136, %p137
      %p139 = scmp.ne.s32.totalorder %s131, %s133
      %p140 = scmp.eq.s32.totalorder %s34, 1
      %p141 = por %p139, %p140
      %p142 = scmp.ne.s32.totalorder %s133, %s134
      %p143 = scmp.eq.s32.totalorder %s34, 0
      %p144 = por %p142, %p143
      %p145 = scmp.ne.s32.totalorder %s133, %s134
      %p146 = scmp.eq.s32.totalorder %s35, 1
      %p147 = por %p145, %p146
      %p149 = scmp.ne.s32.totalorder %s134, %s148
      %p150 = scmp.eq.s32.totalorder %s35, 0
      %p151 = por %p149, %p150
      %s153 = sadd.s32 %s152, 1
      %p156 = scmp.eq.s32.totalorder %s29, 1
      %p157 = scmp.ne.s32.totalorder %s152, %s154
      %p158 = scmp.eq.s32.totalorder %s29, 0
      %p159 = por %p157, %p158
      %p160 = scmp.ne.s32.totalorder %s152, %s154
      %p161 = scmp.eq.s32.totalorder %s34, 1
      %p162 = por %p160, %p161
      %p163 = scmp.ne.s32.totalorder %s154, %s155
      %p164 = scmp.eq.s32.totalorder %s34, 0
      %p165 = por %p163, %p164
      %p166 = scmp.ne.s32.totalorder %s154, %s155
      %p167 = scmp.eq.s32.totalorder %s35, 1
      %p168 = por %p166, %p167
      %p170 = scmp.ne.s32.totalorder %s155, %s169
      %p171 = scmp.eq.s32.totalorder %s35, 0
      %p172 = por %p170, %p171
      %s174 = sadd.s32 %s173, 1
      %p177 = scmp.eq.s32.totalorder %s29, 1
      %p178 = scmp.ne.s32.totalorder %s173, %s175
      %p179 = scmp.eq.s32.totalorder %s29, 0
      %p180 = por %p178, %p179
      %p181 = scmp.ne.s32.totalorder %s173, %s175
      %p182 = scmp.eq.s32.totalorder %s34, 1
      %p183 = por %p181, %p182
      %p184 = scmp.ne.s32.totalorder %s175, %s176
      %p185 = scmp.eq.s32.totalorder %s34, 0
      %p186 = por %p184, %p185
      %p187 = scmp.ne.s32.totalorder %s175, %s176
      %p188 = scmp.eq.s32.totalorder %s35, 1
      %p189 = por %p187, %p188
      %p191 = scmp.ne.s32.totalorder %s176, %s190
      %p192 = scmp.eq.s32.totalorder %s35, 0
      %p193 = por %p191, %p192
      %s195 = sadd.s32 %s194, 1
      %p198 = scmp.eq.s32.totalorder %s29, 1
      %p199 = scmp.ne.s32.totalorder %s194, %s196
      %p200 = scmp.eq.s32.totalorder %s29, 0
      %p201 = por %p199, %p200
      %p202 = scmp.ne.s32.totalorder %s194, %s196
      %p203 = scmp.eq.s32.totalorder %s34, 1
      %p204 = por %p202, %p203
      %p205 = scmp.ne.s32.totalorder %s196, %s197
      %p206 = scmp.eq.s32.totalorder %s34, 0
      %p207 = por %p205, %p206
      %p208 = scmp.ne.s32.totalorder %s196, %s197
      %p209 = scmp.eq.s32.totalorder %s35, 1
      %p210 = por %p208, %p209
      %p212 = scmp.ne.s32.totalorder %s197, %s211
      %p213 = scmp.eq.s32.totalorder %s35, 0
      %p214 = por %p212, %p213
      %s216 = sadd.s32 %s215, 1
      %p219 = scmp.eq.s32.totalorder %s29, 1
      %p220 = scmp.ne.s32.totalorder %s215, %s217
      %p221 = scmp.eq.s32.totalorder %s29, 0
      %p222 = por %p220, %p221
      %p223 = scmp.ne.s32.totalorder %s215, %s217
      %p224 = scmp.eq.s32.totalorder %s34, 1
      %p225 = por %p223, %p224
      %p226 = scmp.ne.s32.totalorder %s217, %s218
      %p227 = scmp.eq.s32.totalorder %s34, 0
      %p228 = por %p226, %p227
      %p229 = scmp.ne.s32.totalorder %s217, %s218
      %p230 = scmp.eq.s32.totalorder %s35, 1
      %p231 = por %p229, %p230
      %p233 = scmp.ne.s32.totalorder %s218, %s232
      %p234 = scmp.eq.s32.totalorder %s35, 0
      %p235 = por %p233, %p234
      %s237 = sadd.s32 %s236, 1
      %p240 = scmp.eq.s32.totalorder %s29, 1
      %p241 = scmp.ne.s32.totalorder %s236, %s238
      %p242 = scmp.eq.s32.totalorder %s29, 0
      %p243 = por %p241, %p242
      %p244 = scmp.ne.s32.totalorder %s236, %s238
      %p245 = scmp.eq.s32.totalorder %s34, 1
      %p246 = por %p244, %p245
      %p247 = scmp.ne.s32.totalorder %s238, %s239
      %p248 = scmp.eq.s32.totalorder %s34, 0
      %p249 = por %p247, %p248
      %p250 = scmp.ne.s32.totalorder %s238, %s239
      %p251 = scmp.eq.s32.totalorder %s35, 1
      %p252 = por %p250, %p251
      %p254 = scmp.ne.s32.totalorder %s239, %s253
      %p255 = scmp.eq.s32.totalorder %s35, 0
      %p256 = por %p254, %p255
      %s258 = sadd.s32 %s257, 1
      %p261 = scmp.eq.s32.totalorder %s29, 1
      %p262 = scmp.ne.s32.totalorder %s257, %s259
      %p263 = scmp.eq.s32.totalorder %s29, 0
      %p264 = por %p262, %p263
      %p265 = scmp.ne.s32.totalorder %s257, %s259
      %p266 = scmp.eq.s32.totalorder %s34, 1
      %p267 = por %p265, %p266
      %p268 = scmp.ne.s32.totalorder %s259, %s260
      %p269 = scmp.eq.s32.totalorder %s34, 0
      %p270 = por %p268, %p269
      %p271 = scmp.ne.s32.totalorder %s259, %s260
      %p272 = scmp.eq.s32.totalorder %s35, 1
      %p273 = por %p271, %p272
      %p275 = scmp.ne.s32.totalorder %s260, %s274
      %p276 = scmp.eq.s32.totalorder %s35, 0
      %p277 = por %p275, %p276
      %s279 = sadd.s32 %s278, 1
      %p282 = scmp.eq.s32.totalorder %s29, 1
      %p283 = scmp.ne.s32.totalorder %s278, %s280
      %p284 = scmp.eq.s32.totalorder %s29, 0
      %p285 = por %p283, %p284
      %p286 = scmp.ne.s32.totalorder %s278, %s280
      %p287 = scmp.eq.s32.totalorder %s34, 1
      %p288 = por %p286, %p287
      %p289 = scmp.ne.s32.totalorder %s280, %s281
      %p290 = scmp.eq.s32.totalorder %s34, 0
      %p291 = por %p289, %p290
      %p292 = scmp.ne.s32.totalorder %s280, %s281
      %p293 = scmp.eq.s32.totalorder %s35, 1
      %p294 = por %p292, %p293
      %p296 = scmp.ne.s32.totalorder %s281, %s295
      %p297 = scmp.eq.s32.totalorder %s35, 0
      %p298 = por %p296, %p297
      %s300 = sadd.s32 %s299, 1
      %p303 = scmp.eq.s32.totalorder %s29, 1
      %p304 = scmp.ne.s32.totalorder %s299, %s301
      %p305 = scmp.eq.s32.totalorder %s29, 0
      %p306 = por %p304, %p305
      %p307 = scmp.ne.s32.totalorder %s299, %s301
      %p308 = scmp.eq.s32.totalorder %s34, 1
      %p309 = por %p307, %p308
      %p310 = scmp.ne.s32.totalorder %s301, %s302
      %p311 = scmp.eq.s32.totalorder %s34, 0
      %p312 = por %p310, %p311
      %p313 = scmp.ne.s32.totalorder %s301, %s302
      %p314 = scmp.eq.s32.totalorder %s35, 1
      %p315 = por %p313, %p314
      %p317 = scmp.ne.s32.totalorder %s302, %s316
      %p318 = scmp.eq.s32.totalorder %s35, 0
      %p319 = por %p317, %p318
      %s321 = sadd.s32 %s320, 1
      %p324 = scmp.eq.s32.totalorder %s29, 1
      %p325 = scmp.ne.s32.totalorder %s320, %s322
      %p326 = scmp.eq.s32.totalorder %s29, 0
      %p327 = por %p325, %p326
      %p328 = scmp.ne.s32.totalorder %s320, %s322
      %p329 = scmp.eq.s32.totalorder %s34, 1
      %p330 = por %p328, %p329
      %p331 = scmp.ne.s32.totalorder %s322, %s323
      %p332 = scmp.eq.s32.totalorder %s34, 0
      %p333 = por %p331, %p332
      %p334 = scmp.ne.s32.totalorder %s322, %s323
      %p335 = scmp.eq.s32.totalorder %s35, 1
      %p336 = por %p334, %p335
      %p338 = scmp.ne.s32.totalorder %s323, %s337
      %p339 = scmp.eq.s32.totalorder %s35, 0
      %p340 = por %p338, %p339
      %s342 = sadd.s32 %s341, 1
      %p345 = scmp.eq.s32.totalorder %s29, 1
      %p346 = scmp.ne.s32.totalorder %s341, %s343
      %p347 = scmp.eq.s32.totalorder %s29, 0
      %p348 = por %p346, %p347
      %p349 = scmp.ne.s32.totalorder %s341, %s343
      %p350 = scmp.eq.s32.totalorder %s34, 1
      %p351 = por %p349, %p350
      %p352 = scmp.ne.s32.totalorder %s343, %s344
      %p353 = scmp.eq.s32.totalorder %s34, 0
      %p354 = por %p352, %p353
      %p355 = scmp.ne.s32.totalorder %s343, %s344
      %p356 = scmp.eq.s32.totalorder %s35, 1
      %p357 = por %p355, %p356
      %p359 = scmp.ne.s32.totalorder %s344, %s358
      %p360 = scmp.eq.s32.totalorder %s35, 0
      %p361 = por %p359, %p360
      %s363 = sadd.s32 %s362, 1
      %p366 = scmp.eq.s32.totalorder %s29, 1
      %p367 = scmp.ne.s32.totalorder %s362, %s364
      %p368 = scmp.eq.s32.totalorder %s29, 0
      %p369 = por %p367, %p368
      %p370 = scmp.ne.s32.totalorder %s362, %s364
      %p371 = scmp.eq.s32.totalorder %s34, 1
      %p372 = por %p370, %p371
      %p373 = scmp.ne.s32.totalorder %s364, %s365
      %p374 = scmp.eq.s32.totalorder %s34, 0
      %p375 = por %p373, %p374
      %p376 = scmp.ne.s32.totalorder %s364, %s365
      %p377 = scmp.eq.s32.totalorder %s35, 1
      %p378 = por %p376, %p377
      %p380 = scmp.ne.s32.totalorder %s365, %s379
      %p381 = scmp.eq.s32.totalorder %s35, 0
      %p382 = por %p380, %p381
      %s383 = ssub.s32 %s36, %s48
      %s384 = ssub.s32 %s37, %s44
      %s385 = sor.u32 %s383, %s384
      %p386 = scmp.eq.s32.totalorder %s385, 0
      %s388 = sadd.s32 %s387, 1
      %s389 = scalar_select %p386, %s387, %s388
      %p392 = pneg %p386
      %p393 = scmp.eq.s32.totalorder %s29, 1
      %p394 = por %p392, %p393
      %p395 = scmp.ne.s32.totalorder %s387, %s390
      %p396 = scmp.eq.s32.totalorder %s29, 0
      %p397 = por %p395, %p396
      %p398 = scmp.ne.s32.totalorder %s387, %s390
      %p399 = scmp.eq.s32.totalorder %s34, 1
      %p400 = por %p398, %p399
      %p401 = scmp.ne.s32.totalorder %s390, %s391
      %p402 = scmp.eq.s32.totalorder %s34, 0
      %p403 = por %p401, %p402
      %p404 = scmp.ne.s32.totalorder %s390, %s391
      %p405 = scmp.eq.s32.totalorder %s35, 1
      %p406 = por %p404, %p405
      %p408 = scmp.ne.s32.totalorder %s391, %s407
      %p409 = scmp.eq.s32.totalorder %s35, 0
      %p410 = por %p408, %p409
      %p411 = scmp.le.s32.totalorder 1, %s29
      %p412 = scmp.lt.s32.totalorder %s29, 3
      %p413 = pnand %p411, %p412
      %p414 = pneg %p413
      // Predicated region
      $region9: #{tpu_custom_call.1} parent=5 // pred_check
        _
      $region10: #{tpu_custom_call.1} parent=5 // pred_check_branch
        %416 = sbr.rel (%p413) target = $region12
      $region11: #{tpu_custom_call.1} parent=5 // pred_region
        %s417 = ssub.s32 %s29, 1
        // Predicated region
        $region13: #{tpu_custom_call.1} parent=11 // pred_check
          %p418 = pneg %p144
        $region14: #{tpu_custom_call.1} parent=11 // pred_check_branch
          %420 = sbr.rel (%p418) target = $region16
        $region15: #{tpu_custom_call.1} parent=11 // pred_region
          _
        $region16: #{tpu_custom_call.1} parent=11 // pred_fallthru
          _
        // Predicated region
        $region17: #{tpu_custom_call.1} parent=11 // pred_check
          %p421 = pneg %p165
        $region18: #{tpu_custom_call.1} parent=11 // pred_check_branch
          %423 = sbr.rel (%p421) target = $region20
        $region19: #{tpu_custom_call.1} parent=11 // pred_region
          _
        $region20: #{tpu_custom_call.1} parent=11 // pred_fallthru
          _
        // Predicated region
        $region21: #{tpu_custom_call.1} parent=11 // pred_check
          %p424 = pneg %p186
        $region22: #{tpu_custom_call.1} parent=11 // pred_check_branch
          %426 = sbr.rel (%p424) target = $region24
        $region23: #{tpu_custom_call.1} parent=11 // pred_region
          %s428 = ssub.s32 256, 256
          %429 = vsyncadd [#allocation11], %s428
          %s430 = sshll.u32 [#allocation10], 4
          %s431 = int_to_ptr.vmem [resolvable:$true] %s430
          %436 = dma.hbm_to_vmem [thread:$0]  %s5, 256, %s431, [#allocation11], 64, 64, 4
        $region24: #{tpu_custom_call.1} parent=11 // pred_fallthru
          _
        // Predicated region
        $region25: #{tpu_custom_call.1} parent=11 // pred_check
          %p437 = pneg %p207
        $region26: #{tpu_custom_call.1} parent=11 // pred_check_branch
          %439 = sbr.rel (%p437) target = $region28
        $region27: #{tpu_custom_call.1} parent=11 // pred_region
          _
        $region28: #{tpu_custom_call.1} parent=11 // pred_fallthru
          _
        // Predicated region
        $region29: #{tpu_custom_call.1} parent=11 // pred_check
          %p440 = pneg %p228
        $region30: #{tpu_custom_call.1} parent=11 // pred_check_branch
          %442 = sbr.rel (%p440) target = $region32
        $region31: #{tpu_custom_call.1} parent=11 // pred_region
          _
        $region32: #{tpu_custom_call.1} parent=11 // pred_fallthru
          _
        // Predicated region
        $region33: #{tpu_custom_call.1} parent=11 // pred_check
          %p443 = pneg %p249
        $region34: #{tpu_custom_call.1} parent=11 // pred_check_branch
          %445 = sbr.rel (%p443) target = $region36
        $region35: #{tpu_custom_call.1} parent=11 // pred_region
          _
        $region36: #{tpu_custom_call.1} parent=11 // pred_fallthru
          _
        // Predicated region
        $region37: #{tpu_custom_call.1} parent=11 // pred_check
          %p446 = pneg %p270
        $region38: #{tpu_custom_call.1} parent=11 // pred_check_branch
          %448 = sbr.rel (%p446) target = $region40
        $region39: #{tpu_custom_call.1} parent=11 // pred_region
          %s450 = ssub.s32 256, 256
          %451 = vsyncadd [#allocation11], %s450
          %s452 = sshll.u32 [#allocation12], 4
          %s453 = int_to_ptr.vmem [resolvable:$true] %s452
          %458 = dma.hbm_to_vmem [thread:$0]  %s9, 256, %s453, [#allocation11], 64, 64, 4
        $region40: #{tpu_custom_call.1} parent=11 // pred_fallthru
          _
        // Predicated region
        $region41: #{tpu_custom_call.1} parent=11 // pred_check
          %p459 = pneg %p291
        $region42: #{tpu_custom_call.1} parent=11 // pred_check_branch
          %461 = sbr.rel (%p459) target = $region44
        $region43: #{tpu_custom_call.1} parent=11 // pred_region
          %s463 = ssub.s32 16, 16
          %464 = vsyncadd [#allocation14], %s463
          %s466 = sshll.u32 [#allocation13], 4
          %s467 = int_to_ptr.vmem [resolvable:$true] %s466
          %469 = dma.hbm_to_vmem [thread:$0]  %s10, 16, %s467, [#allocation14]
        $region44: #{tpu_custom_call.1} parent=11 // pred_fallthru
          _
        // Predicated region
        $region45: #{tpu_custom_call.1} parent=11 // pred_check
          %p470 = pneg %p312
        $region46: #{tpu_custom_call.1} parent=11 // pred_check_branch
          %472 = sbr.rel (%p470) target = $region48
        $region47: #{tpu_custom_call.1} parent=11 // pred_region
          _
        $region48: #{tpu_custom_call.1} parent=11 // pred_fallthru
          _
        // Predicated region
        $region49: #{tpu_custom_call.1} parent=11 // pred_check
          %p473 = pneg %p333
        $region50: #{tpu_custom_call.1} parent=11 // pred_check_branch
          %475 = sbr.rel (%p473) target = $region52
        $region51: #{tpu_custom_call.1} parent=11 // pred_region
          _
        $region52: #{tpu_custom_call.1} parent=11 // pred_fallthru
          _
        // Predicated region
        $region53: #{tpu_custom_call.1} parent=11 // pred_check
          %p476 = pneg %p354
        $region54: #{tpu_custom_call.1} parent=11 // pred_check_branch
          %478 = sbr.rel (%p476) target = $region56
        $region55: #{tpu_custom_call.1} parent=11 // pred_region
          _
        $region56: #{tpu_custom_call.1} parent=11 // pred_fallthru
          _
        // Predicated region
        $region57: #{tpu_custom_call.1} parent=11 // pred_check
          %p479 = pneg %p375
        $region58: #{tpu_custom_call.1} parent=11 // pred_check_branch
          %481 = sbr.rel (%p479) target = $region60
        $region59: #{tpu_custom_call.1} parent=11 // pred_region
          _
        $region60: #{tpu_custom_call.1} parent=11 // pred_fallthru
          _
      $region12: #{tpu_custom_call.1} parent=5 // pred_fallthru
        _
      %p482 = scmp.lt.s32.totalorder %s29, 2
      // Predicated region
      $region61: #{tpu_custom_call.1} parent=5 // pred_check
        %p483 = pneg %p482
      $region62: #{tpu_custom_call.1} parent=5 // pred_check_branch
        %485 = sbr.rel (%p483) target = $region64
      $region63: #{tpu_custom_call.1} parent=5 // pred_region
        // Predicated region
        $region65: #{tpu_custom_call.1} parent=63 // pred_check
          %p486 = pneg %p61
        $region66: #{tpu_custom_call.1} parent=63 // pred_check_branch
          %488 = sbr.rel (%p486) target = $region68
        $region67: #{tpu_custom_call.1} parent=63 // pred_region
          %p489 = scmp.lt.s32.totalorder %s36, 1
          %s490 = scalar_select %p489, %s36, 1
          %s491 = smul.addr %s490, 8
          %s492 = scalar_lea.vmem %s0, %s491
        $region68: #{tpu_custom_call.1} parent=63 // pred_fallthru
          _
        // Predicated region
        $region69: #{tpu_custom_call.1} parent=63 // pred_check
          %p493 = pneg %p89
        $region70: #{tpu_custom_call.1} parent=63 // pred_check_branch
          %495 = sbr.rel (%p493) target = $region72
        $region71: #{tpu_custom_call.1} parent=63 // pred_region
          %p496 = scmp.lt.s32.totalorder %s36, 1
          %s497 = scalar_select %p496, %s36, 1
          %p498 = scmp.lt.s32.totalorder %s37, 0
          %s499 = scalar_select %p498, %s37, 0
          %s500 = sadd.s32 %s499, %s497
          %s501 = smul.addr %s500, 8
          %s502 = scalar_lea.vmem %s1, %s501
        $region72: #{tpu_custom_call.1} parent=63 // pred_fallthru
          _
        // Predicated region
        $region73: #{tpu_custom_call.1} parent=63 // pred_check
          %p503 = pneg %p117
        $region74: #{tpu_custom_call.1} parent=63 // pred_check_branch
          %505 = sbr.rel (%p503) target = $region76
        $region75: #{tpu_custom_call.1} parent=63 // pred_region
          %s506 = sand.u32 %s107, 1
          %s507 = scalar_lea.sflag [#allocation8], %s506
          %s508 = sand.u32 %s107, 1
          %s509 = smul.addr %s508, 4
          %s510 = scalar_lea.vmem [#allocation7], %s509
          %s512 = ssub.s32 64, 64
          %513 = vsyncadd %s507, %s512
          %s514 = sadd.s32 %s37, %s36
          %s515 = smul.addr %s514, 64
          %s516 = scalar_lea.hbm %s2, %s515
          %s518 = sshll.u32 %s510, 4
          %s519 = int_to_ptr.vmem [resolvable:$true] %s518
          %521 = dma.hbm_to_vmem [thread:$0]  %s516, 64, %s519, %s507
        $region76: #{tpu_custom_call.1} parent=63 // pred_fallthru
          _
      $region64: #{tpu_custom_call.1} parent=5 // pred_fallthru
        _
      %p522 = scmp.le.s32.totalorder 1, %s29
      %p523 = scmp.lt.s32.totalorder %s29, 3
      %p524 = pnand %p522, %p523
      %p525 = pneg %p524
      // Predicated region
      $region77: #{tpu_custom_call.1} parent=5 // pred_check
        _
      $region78: #{tpu_custom_call.1} parent=5 // pred_check_branch
        %527 = sbr.rel (%p524) target = $region80
      $region79: #{tpu_custom_call.1} parent=5 // pred_region
        %s528 = ssub.s32 %s29, 1
        %s529 = sand.u32 %s110, 1
        %s530 = scalar_lea.sflag [#allocation8], %s529
        %s531 = sand.u32 %s110, 1
        %s532 = smul.addr %s531, 4
        %s533 = scalar_lea.vmem [#allocation7], %s532
        // Predicated region
        $region81: #{tpu_custom_call.1} parent=79 // pred_check
          %p534 = pneg %p123
        $region82: #{tpu_custom_call.1} parent=79 // pred_check_branch
          %536 = sbr.rel (%p534) target = $region84
        $region83: #{tpu_custom_call.1} parent=79 // pred_region
          %537 = dma.done %s530, 64
        $region84: #{tpu_custom_call.1} parent=79 // pred_fallthru
          _
        // Predicated region
        $region85: #{tpu_custom_call.1} parent=79 // pred_check
          %p538 = pneg %p186
        $region86: #{tpu_custom_call.1} parent=79 // pred_check_branch
          %540 = sbr.rel (%p538) target = $region88
        $region87: #{tpu_custom_call.1} parent=79 // pred_region
          %541 = dma.done [#allocation11], 256
        $region88: #{tpu_custom_call.1} parent=79 // pred_fallthru
          _
        // Predicated region
        $region89: #{tpu_custom_call.1} parent=79 // pred_check
          %p542 = pneg %p270
        $region90: #{tpu_custom_call.1} parent=79 // pred_check_branch
          %544 = sbr.rel (%p542) target = $region92
        $region91: #{tpu_custom_call.1} parent=79 // pred_region
          %545 = dma.done [#allocation11], 256
        $region92: #{tpu_custom_call.1} parent=79 // pred_fallthru
          _
        // Predicated region
        $region93: #{tpu_custom_call.1} parent=79 // pred_check
          %p546 = pneg %p291
        $region94: #{tpu_custom_call.1} parent=79 // pred_check_branch
          %548 = sbr.rel (%p546) target = $region96
        $region95: #{tpu_custom_call.1} parent=79 // pred_region
          %549 = dma.done [#allocation14], 16
        $region96: #{tpu_custom_call.1} parent=79 // pred_fallthru
          _
        %p550 = scmp.lt.s32.totalorder %s38, 1
        %s551 = scalar_select %p550, %s38, 1
        %s552 = smul.addr %s551, 8
        %s553 = scalar_lea.vmem %s0, %s552
        %p554 = pneg %p67
        %p555 = pneg %p64
        %p556 = scmp.lt.s32.totalorder %s38, 1
        %s557 = scalar_select %p556, %s38, 1
        %p558 = scmp.lt.s32.totalorder %s39, 0
        %s559 = scalar_select %p558, %s39, 0
        %s560 = sadd.s32 %s559, %s557
        %s561 = smul.addr %s560, 8
        %s562 = scalar_lea.vmem %s1, %s561
        %p563 = pneg %p95
        %p564 = pneg %p92
        %s565 = sand.u32 %s110, 1
        %s566 = scalar_lea.sflag [#allocation8], %s565
        %s567 = sand.u32 %s110, 1
        %s568 = smul.addr %s567, 4
        %s569 = scalar_lea.vmem [#allocation7], %s568
        %p570 = pneg %p123
        %p571 = pneg %p120
        %p572 = pneg %p144
        %p573 = pneg %p141
        %p574 = pneg %p165
        %p575 = pneg %p162
        %p576 = pneg %p186
        %p577 = pneg %p183
        %p578 = pneg %p207
        %p579 = pneg %p204
        %p580 = pneg %p228
        %p581 = pneg %p225
        %p582 = pneg %p249
        %p583 = pneg %p246
        %p584 = pneg %p270
        %p585 = pneg %p267
        %p586 = pneg %p291
        %p587 = pneg %p288
        %p588 = pneg %p312
        %p589 = pneg %p309
        %p590 = pneg %p333
        %p591 = pneg %p330
        %p592 = pneg %p354
        %p593 = pneg %p351
        %p594 = pneg %p375
        %p595 = pneg %p372
        %p596 = pneg %p403
        %p597 = pneg %p400
        %s598 = sand.u32 %s390, 1
        %s599 = scalar_lea.sflag [#allocation9], %s598
        %s600 = sand.u32 %s390, 1
        %s601 = smul.addr %s600, 8
        %s602 = scalar_lea.vmem [#allocation15], %s601
        %p603 = scmp.lt.s32.totalorder %s38, 1
        %s604 = scalar_select %p603, %s38, 1
        %s605 = smul.addr %s604, 8
        %s606 = scalar_lea.vmem %s0, %s605
        %p607 = scmp.lt.s32.totalorder %s38, 1
        %s608 = scalar_select %p607, %s38, 1
        %p609 = scmp.lt.s32.totalorder %s39, 0
        %s610 = scalar_select %p609, %s39, 0
        %s611 = sadd.s32 %s610, %s608
        %s612 = smul.addr %s611, 8
        %s613 = scalar_lea.vmem %s1, %s612
        %p615 = scmp.eq.s32.totalorder %s39, 0
        // Predicated region
        $region97: #{tpu_custom_call.1} parent=79 // pred_check
          %p616 = pneg %p615
        $region98: #{tpu_custom_call.1} parent=79 // pred_check_branch
          %618 = sbr.rel (%p616) target = $region100
        $region99: #{tpu_custom_call.1} parent=79 // pred_region
          %v619 = vld [vmem:[%s606] sm:$0xff]
          %v620 = vpack.c.bf16 %v619, %v619
          %v621 = vld [vmem:[%s3] sm:$0xf]
          %v622 = vld [vmem:[%s3 + $0x4] sm:$0xf]
          %v623 = vld [vmem:[%s3 + $0x8] sm:$0xf]
          %v624 = vld [vmem:[%s3 + $0xc] sm:$0xf]
          %v625 = vld [vmem:[%s4] sm:$0x1]
          %v627 = vlaneseq
          %v628 = vshrl.u32 %v627, 7
          %v629 = vsub.s32 0, %v628
          %v630 = vrot.slane %v625, %v629
          %v636 = vunpack.c.l.b16 %v621
          %v637 = vunpack.c.l.b16 %v622
          %v638 = vunpack.c.l.b16 %v623
          %v639 = vunpack.c.l.b16 %v624
          %v640 = vpack.c.b16 %v637, %v636
          %v641 = vpack.c.b16 %v639, %v638
          %vm644 = vcmask 261120
          %v646 = vsel %vm644, %v620, 0
          %648 = vmatprep.subr.bf16.mxu0 0
          %649 = vmatpush1.bf16.msra.mxu0 0
          %650 = vmatprep.subr.bf16.mxu0 0
          %651 = vmatpush1.bf16.msra.mxu0 0
          %652 = vmatprep.subr.bf16.mxu0 0
          %653 = vmatpush1.bf16.msra.mxu0 0
          %654 = vmatprep.subr.bf16.mxu0 0
          %655 = vmatpush1.bf16.msra.mxu0 0
          %656 = vmatprep.subr.bf16.mxu0 0
          %657 = vmatpush1.bf16.msra.mxu0 0
          %658 = vmatprep.subr.bf16.mxu0 0
          %659 = vmatpush1.bf16.msra.mxu0 0
          %660 = vmatprep.subr.bf16.mxu0 0
          %661 = vmatpush1.bf16.msra.mxu0 %v641
          %662 = vmatprep.subr.bf16.mxu0 0
          %663 = vmatpush1.bf16.msra.mxu0 %v640
          %664 = vmatprep.subr.bf16.mxu0 0
          %665 = vmatpush2.bf16.msra.mxu0 0
          %666 = vmatprep.subr.bf16.mxu0 0
          %667 = vmatpush2.bf16.msra.mxu0 0
          %668 = vmatprep.subr.bf16.mxu0 0
          %669 = vmatpush2.bf16.msra.mxu0 0
          %670 = vmatprep.subr.bf16.mxu0 0
          %671 = vmatpush2.bf16.msra.mxu0 0
          %672 = vmatprep.subr.bf16.mxu0 0
          %673 = vmatpush2.bf16.msra.mxu0 0
          %674 = vmatprep.subr.bf16.mxu0 0
          %675 = vmatpush2.bf16.msra.mxu0 0
          %676 = vmatprep.subr.bf16.mxu0 0
          %677 = vmatpush2.bf16.msra.mxu0 0
          %678 = vmatprep.subr.bf16.mxu0 0
          %679 = vmatpush2.bf16.msra.mxu0 0
          %680 = vmatprep.mubr.bf16.mxu0 0
          %681 = vmatmul.mubr.bf16.gmra.mxu0 %v646
          %v682 = vpop.f32.mrf.mxu0
          %v683 = vadd.f32 %v630, %v682
          %v684 = vpop.f32.mrf.mxu0
          %v685 = vpop.f32.mrf.mxu0
          %v686 = vpop.f32.mrf.mxu0
          %687 = vdwg.mxu0
          %v688 = vpack.c.bf16 %v683, %v683
          %vm689 = vcmask 257024
          %690 = vst.msk [vmem:[#allocation2] sm:$0xf] %vm689, %v688
          %v692 = vunpack.c.l.b16 %v688
          %v693 = vpack.c.b16 %v692, %v692
          %694 = vrot.lane.b32.xlu0 %v693, 96
          %v695 = vpop.permute.xlu0 %694
          %vm697 = vcmask 60416
          %698 = vst.msk [vmem:[#allocation3] sm:$0xf] %vm697, %v695
          %699 = vrot.lane.b32.xlu0 %v693, 64
          %v700 = vpop.permute.xlu0 %699
          %702 = vst.msk [vmem:[#allocation4] sm:$0xf] %vm697, %v700
          %703 = vrot.lane.b32.xlu0 %v693, 88
          %v704 = vpop.permute.xlu0 %703
          %s706 = scalar_lea.vmem [#allocation3], 4
          %707 = vst.msk [vmem:[%s706] sm:$0xf] %vm697, %v704
          %708 = vrot.lane.b32.xlu0 %v693, 56
          %v709 = vpop.permute.xlu0 %708
          %s711 = scalar_lea.vmem [#allocation4], 4
          %712 = vst.msk [vmem:[%s711] sm:$0xf] %vm697, %v709
          %713 = vrot.lane.b32.xlu0 %v693, 80
          %v714 = vpop.permute.xlu0 %713
          %s716 = scalar_lea.vmem [#allocation3], 8
          %717 = vst.msk [vmem:[%s716] sm:$0xf] %vm697, %v714
          %718 = vrot.lane.b32.xlu0 %v693, 48
          %v719 = vpop.permute.xlu0 %718
          %s721 = scalar_lea.vmem [#allocation4], 8
          %722 = vst.msk [vmem:[%s721] sm:$0xf] %vm697, %v719
          %723 = vrot.lane.b32.xlu0 %v693, 72
          %v724 = vpop.permute.xlu0 %723
          %s726 = scalar_lea.vmem [#allocation3], 12
          %727 = vst.msk [vmem:[%s726] sm:$0xf] %vm697, %v724
          %728 = vrot.lane.b32.xlu0 %v693, 40
          %v729 = vpop.permute.xlu0 %728
          %s731 = scalar_lea.vmem [#allocation4], 12
          %732 = vst.msk [vmem:[%s731] sm:$0xf] %vm697, %v729
        $region100: #{tpu_custom_call.1} parent=79 // pred_fallthru
          _
        %s733 = smul.addr %s39, 4
        %s734 = scalar_lea.vmem [#allocation2], %s733
        %v735 = vld [vmem:[%s734] sm:$0xf]
        %vm736 = vcmask 60416
        %737 = vst.msk [vmem:[#allocation5] sm:$0xf] %vm736, %v735
        %739 = vrot.lane.b32.xlu0 %v735, 120
        %v740 = vpop.permute.xlu0 %739
        %s742 = scalar_lea.vmem [#allocation5], 4
        %743 = vst.msk [vmem:[%s742] sm:$0xf] %vm736, %v740
        %744 = vrot.lane.b32.xlu0 %v735, 112
        %v745 = vpop.permute.xlu0 %744
        %s747 = scalar_lea.vmem [#allocation5], 8
        %748 = vst.msk [vmem:[%s747] sm:$0xf] %vm736, %v745
        %749 = vrot.lane.b32.xlu0 %v735, 104
        %v750 = vpop.permute.xlu0 %749
        %s752 = scalar_lea.vmem [#allocation5], 12
        %753 = vst.msk [vmem:[%s752] sm:$0xf] %vm736, %v750
        %v754 = vld [vmem:[#allocation5] sm:$0xf]
        %v755 = vld [vmem:[#allocation5 + $0x4] sm:$0xf]
        %v756 = vld [vmem:[#allocation5 + $0x8] sm:$0xf]
        %v757 = vld [vmem:[#allocation5 + $0xc] sm:$0xf]
        %v758 = vld [vmem:[#allocation3] sm:$0xf]
        %v759 = vld [vmem:[#allocation3 + $0x4] sm:$0xf]
        %v760 = vld [vmem:[#allocation3 + $0x8] sm:$0xf]
        %v761 = vld [vmem:[#allocation3 + $0xc] sm:$0xf]
        %v762 = vld [vmem:[#allocation4] sm:$0xf]
        %v763 = vld [vmem:[#allocation4 + $0x4] sm:$0xf]
        %v764 = vld [vmem:[#allocation4 + $0x8] sm:$0xf]
        %v765 = vld [vmem:[#allocation4 + $0xc] sm:$0xf]
        %vm766 = vcmask 64512
        %v768 = vsel %vm766, %v754, 0
        %v771 = vsel %vm766, %v758, 0
        %773 = vmatprep.subr.bf16.mxu0 0
        %774 = vmatpush1.bf16.xpose.msra.mxu0 0
        %775 = vmatprep.subr.bf16.mxu0 0
        %776 = vmatpush1.bf16.xpose.msra.mxu0 0
        %777 = vmatprep.subr.bf16.mxu0 0
        %778 = vmatpush1.bf16.xpose.msra.mxu0 0
        %779 = vmatprep.subr.bf16.mxu0 0
        %780 = vmatpush1.bf16.xpose.msra.mxu0 0
        %781 = vmatprep.subr.bf16.mxu0 0
        %782 = vmatpush1.bf16.xpose.msra.mxu0 0
        %783 = vmatprep.subr.bf16.mxu0 0
        %784 = vmatpush1.bf16.xpose.msra.mxu0 0
        %785 = vmatprep.subr.bf16.mxu0 0
        %786 = vmatpush1.bf16.xpose.msra.mxu0 0
        %787 = vmatprep.subr.bf16.mxu0 0
        %788 = vmatpush1.bf16.xpose.msra.mxu0 %v771
        %789 = vmatprep.subr.bf16.mxu0 0
        %790 = vmatpush2.bf16.xpose.msra.mxu0 0
        %791 = vmatprep.subr.bf16.mxu0 0
        %792 = vmatpush2.bf16.xpose.msra.mxu0 0
        %793 = vmatprep.subr.bf16.mxu0 0
        %794 = vmatpush2.bf16.xpose.msra.mxu0 0
        %795 = vmatprep.subr.bf16.mxu0 0
        %796 = vmatpush2.bf16.xpose.msra.mxu0 0
        %797 = vmatprep.subr.bf16.mxu0 0
        %798 = vmatpush2.bf16.xpose.msra.mxu0 0
        %799 = vmatprep.subr.bf16.mxu0 0
        %800 = vmatpush2.bf16.xpose.msra.mxu0 0
        %801 = vmatprep.subr.bf16.mxu0 0
        %802 = vmatpush2.bf16.xpose.msra.mxu0 0
        %803 = vmatprep.subr.bf16.mxu0 0
        %804 = vmatpush2.bf16.xpose.msra.mxu0 0
        %805 = vmatprep.mubr.bf16.mxu0 0
        %806 = vmatmul.mubr.bf16.gmra.mxu0 %v768
        %v807 = vpop.f32.mrf.mxu0
        %v808 = vadd.f32 0.0, %v807
        %v809 = vpop.f32.mrf.mxu0
        %v810 = vpop.f32.mrf.mxu0
        %v811 = vpop.f32.mrf.mxu0
        %812 = vdwg.mxu0
        %v814 = vsel %vm766, %v755, 0
        %v817 = vsel %vm766, %v759, 0
        %819 = vmatprep.subr.bf16.mxu0 0
        %820 = vmatpush1.bf16.xpose.msra.mxu0 0
        %821 = vmatprep.subr.bf16.mxu0 0
        %822 = vmatpush1.bf16.xpose.msra.mxu0 0
        %823 = vmatprep.subr.bf16.mxu0 0
        %824 = vmatpush1.bf16.xpose.msra.mxu0 0
        %825 = vmatprep.subr.bf16.mxu0 0
        %826 = vmatpush1.bf16.xpose.msra.mxu0 0
        %827 = vmatprep.subr.bf16.mxu0 0
        %828 = vmatpush1.bf16.xpose.msra.mxu0 0
        %829 = vmatprep.subr.bf16.mxu0 0
        %830 = vmatpush1.bf16.xpose.msra.mxu0 0
        %831 = vmatprep.subr.bf16.mxu0 0
        %832 = vmatpush1.bf16.xpose.msra.mxu0 0
        %833 = vmatprep.subr.bf16.mxu0 0
        %834 = vmatpush1.bf16.xpose.msra.mxu0 %v817
        %835 = vmatprep.subr.bf16.mxu0 0
        %836 = vmatpush2.bf16.xpose.msra.mxu0 0
        %837 = vmatprep.subr.bf16.mxu0 0
        %838 = vmatpush2.bf16.xpose.msra.mxu0 0
        %839 = vmatprep.subr.bf16.mxu0 0
        %840 = vmatpush2.bf16.xpose.msra.mxu0 0
        %841 = vmatprep.subr.bf16.mxu0 0
        %842 = vmatpush2.bf16.xpose.msra.mxu0 0
        %843 = vmatprep.subr.bf16.mxu0 0
        %844 = vmatpush2.bf16.xpose.msra.mxu0 0
        %845 = vmatprep.subr.bf16.mxu0 0
        %846 = vmatpush2.bf16.xpose.msra.mxu0 0
        %847 = vmatprep.subr.bf16.mxu0 0
        %848 = vmatpush2.bf16.xpose.msra.mxu0 0
        %849 = vmatprep.subr.bf16.mxu0 0
        %850 = vmatpush2.bf16.xpose.msra.mxu0 0
        %851 = vmatprep.mubr.bf16.mxu0 0
        %852 = vmatmul.mubr.bf16.gmra.mxu0 %v814
        %v853 = vpop.f32.mrf.mxu0
        %v854 = vadd.f32 0.0, %v853
        %v855 = vpop.f32.mrf.mxu0
        %v856 = vpop.f32.mrf.mxu0
        %v857 = vpop.f32.mrf.mxu0
        %858 = vdwg.mxu0
        %v860 = vsel %vm766, %v756, 0
        %v863 = vsel %vm766, %v760, 0
        %865 = vmatprep.subr.bf16.mxu0 0
        %866 = vmatpush1.bf16.xpose.msra.mxu0 0
        %867 = vmatprep.subr.bf16.mxu0 0
        %868 = vmatpush1.bf16.xpose.msra.mxu0 0
        %869 = vmatprep.subr.bf16.mxu0 0
        %870 = vmatpush1.bf16.xpose.msra.mxu0 0
        %871 = vmatprep.subr.bf16.mxu0 0
        %872 = vmatpush1.bf16.xpose.msra.mxu0 0
        %873 = vmatprep.subr.bf16.mxu0 0
        %874 = vmatpush1.bf16.xpose.msra.mxu0 0
        %875 = vmatprep.subr.bf16.mxu0 0
        %876 = vmatpush1.bf16.xpose.msra.mxu0 0
        %877 = vmatprep.subr.bf16.mxu0 0
        %878 = vmatpush1.bf16.xpose.msra.mxu0 0
        %879 = vmatprep.subr.bf16.mxu0 0
        %880 = vmatpush1.bf16.xpose.msra.mxu0 %v863
        %881 = vmatprep.subr.bf16.mxu0 0
        %882 = vmatpush2.bf16.xpose.msra.mxu0 0
        %883 = vmatprep.subr.bf16.mxu0 0
        %884 = vmatpush2.bf16.xpose.msra.mxu0 0
        %885 = vmatprep.subr.bf16.mxu0 0
        %886 = vmatpush2.bf16.xpose.msra.mxu0 0
        %887 = vmatprep.subr.bf16.mxu0 0
        %888 = vmatpush2.bf16.xpose.msra.mxu0 0
        %889 = vmatprep.subr.bf16.mxu0 0
        %890 = vmatpush2.bf16.xpose.msra.mxu0 0
        %891 = vmatprep.subr.bf16.mxu0 0
        %892 = vmatpush2.bf16.xpose.msra.mxu0 0
        %893 = vmatprep.subr.bf16.mxu0 0
        %894 = vmatpush2.bf16.xpose.msra.mxu0 0
        %895 = vmatprep.subr.bf16.mxu0 0
        %896 = vmatpush2.bf16.xpose.msra.mxu0 0
        %897 = vmatprep.mubr.bf16.mxu0 0
        %898 = vmatmul.mubr.bf16.gmra.mxu0 %v860
        %v899 = vpop.f32.mrf.mxu0
        %v900 = vadd.f32 0.0, %v899
        %v901 = vpop.f32.mrf.mxu0
        %v902 = vpop.f32.mrf.mxu0
        %v903 = vpop.f32.mrf.mxu0
        %904 = vdwg.mxu0
        %v906 = vsel %vm766, %v757, 0
        %v909 = vsel %vm766, %v761, 0
        %911 = vmatprep.subr.bf16.mxu0 0
        %912 = vmatpush1.bf16.xpose.msra.mxu0 0
        %913 = vmatprep.subr.bf16.mxu0 0
        %914 = vmatpush1.bf16.xpose.msra.mxu0 0
        %915 = vmatprep.subr.bf16.mxu0 0
        %916 = vmatpush1.bf16.xpose.msra.mxu0 0
        %917 = vmatprep.subr.bf16.mxu0 0
        %918 = vmatpush1.bf16.xpose.msra.mxu0 0
        %919 = vmatprep.subr.bf16.mxu0 0
        %920 = vmatpush1.bf16.xpose.msra.mxu0 0
        %921 = vmatprep.subr.bf16.mxu0 0
        %922 = vmatpush1.bf16.xpose.msra.mxu0 0
        %923 = vmatprep.subr.bf16.mxu0 0
        %924 = vmatpush1.bf16.xpose.msra.mxu0 0
        %925 = vmatprep.subr.bf16.mxu0 0
        %926 = vmatpush1.bf16.xpose.msra.mxu0 %v909
        %927 = vmatprep.subr.bf16.mxu0 0
        %928 = vmatpush2.bf16.xpose.msra.mxu0 0
        %929 = vmatprep.subr.bf16.mxu0 0
        %930 = vmatpush2.bf16.xpose.msra.mxu0 0
        %931 = vmatprep.subr.bf16.mxu0 0
        %932 = vmatpush2.bf16.xpose.msra.mxu0 0
        %933 = vmatprep.subr.bf16.mxu0 0
        %934 = vmatpush2.bf16.xpose.msra.mxu0 0
        %935 = vmatprep.subr.bf16.mxu0 0
        %936 = vmatpush2.bf16.xpose.msra.mxu0 0
        %937 = vmatprep.subr.bf16.mxu0 0
        %938 = vmatpush2.bf16.xpose.msra.mxu0 0
        %939 = vmatprep.subr.bf16.mxu0 0
        %940 = vmatpush2.bf16.xpose.msra.mxu0 0
        %941 = vmatprep.subr.bf16.mxu0 0
        %942 = vmatpush2.bf16.xpose.msra.mxu0 0
        %943 = vmatprep.mubr.bf16.mxu0 0
        %944 = vmatmul.mubr.bf16.gmra.mxu0 %v906
        %v945 = vpop.f32.mrf.mxu0
        %v946 = vadd.f32 0.0, %v945
        %v947 = vpop.f32.mrf.mxu0
        %v948 = vpop.f32.mrf.mxu0
        %v949 = vpop.f32.mrf.mxu0
        %950 = vdwg.mxu0
        %v951 = vmul.f32 %v808, 0.35355338
        %v952 = vmul.f32 %v854, 0.35355338
        %v953 = vmul.f32 %v900, 0.35355338
        %v954 = vmul.f32 %v946, 0.35355338
        %v955 = vld [vmem:[%s533] sm:$0xf]
        %v956 = vunpack.c.l.bf16 %v955
        %v957 = vadd.f32 %v951, %v956
        %v958 = vadd.f32 %v952, %v956
        %v959 = vadd.f32 %v953, %v956
        %v960 = vadd.f32 %v954, %v956
        %v961 = vsel %vm766, %v957, -inf
        %962 = vmax.xlane.f32.xlu0 %v961
        %v963 = vpop.xlane.xlu0 %962
        %v964 = vsel %vm766, %v958, -inf
        %965 = vmax.xlane.f32.xlu0 %v964
        %v966 = vpop.xlane.xlu0 %965
        %v967 = vsel %vm766, %v959, -inf
        %968 = vmax.xlane.f32.xlu0 %v967
        %v969 = vpop.xlane.xlu0 %968
        %v970 = vsel %vm766, %v960, -inf
        %971 = vmax.xlane.f32.xlu0 %v970
        %v972 = vpop.xlane.xlu0 %971
        %v973 = vsub.f32 %v957, %v963
        %v974 = vsub.f32 %v958, %v966
        %v975 = vsub.f32 %v959, %v969
        %v976 = vsub.f32 %v960, %v972
        %v977 = vmul.f32 %v973, 1.442695
        %v978 = vpow.pop %v977
        %v979 = vmul.f32 %v974, 1.442695
        %v980 = vpow.pop %v979
        %v981 = vmul.f32 %v975, 1.442695
        %v982 = vpow.pop %v981
        %v983 = vmul.f32 %v976, 1.442695
        %v984 = vpow.pop %v983
        %v985 = vsel %vm766, %v978, 0.0
        %986 = vadd.xlane.f32.xlu0 %v985
        %v987 = vpop.xlane.xlu0 %986
        %v988 = vsel %vm766, %v980, 0.0
        %989 = vadd.xlane.f32.xlu0 %v988
        %v990 = vpop.xlane.xlu0 %989
        %v991 = vsel %vm766, %v982, 0.0
        %992 = vadd.xlane.f32.xlu0 %v991
        %v993 = vpop.xlane.xlu0 %992
        %v994 = vsel %vm766, %v984, 0.0
        %995 = vadd.xlane.f32.xlu0 %v994
        %v996 = vpop.xlane.xlu0 %995
        %v997 = vpack.c.bf16 %v978, %v978
        %v998 = vpack.c.bf16 %v980, %v980
        %v999 = vpack.c.bf16 %v982, %v982
        %v1000 = vpack.c.bf16 %v984, %v984
        %v1002 = vsel %vm766, %v997, 0
        %vm1004 = vcmask 1043456
        %v1006 = vsel %vm1004, %v762, 0
        %1008 = vmatprep.subr.bf16.mxu0 0
        %1009 = vmatpush1.bf16.msra.mxu0 0
        %1010 = vmatprep.subr.bf16.mxu0 0
        %1011 = vmatpush1.bf16.msra.mxu0 0
        %1012 = vmatprep.subr.bf16.mxu0 0
        %1013 = vmatpush1.bf16.msra.mxu0 0
        %1014 = vmatprep.subr.bf16.mxu0 0
        %1015 = vmatpush1.bf16.msra.mxu0 0
        %1016 = vmatprep.subr.bf16.mxu0 0
        %1017 = vmatpush1.bf16.msra.mxu0 0
        %1018 = vmatprep.subr.bf16.mxu0 0
        %1019 = vmatpush1.bf16.msra.mxu0 0
        %1020 = vmatprep.subr.bf16.mxu0 0
        %1021 = vmatpush1.bf16.msra.mxu0 0
        %1022 = vmatprep.subr.bf16.mxu0 0
        %1023 = vmatpush1.bf16.msra.mxu0 %v1006
        %1024 = vmatprep.subr.bf16.mxu0 0
        %1025 = vmatpush2.bf16.msra.mxu0 0
        %1026 = vmatprep.subr.bf16.mxu0 0
        %1027 = vmatpush2.bf16.msra.mxu0 0
        %1028 = vmatprep.subr.bf16.mxu0 0
        %1029 = vmatpush2.bf16.msra.mxu0 0
        %1030 = vmatprep.subr.bf16.mxu0 0
        %1031 = vmatpush2.bf16.msra.mxu0 0
        %1032 = vmatprep.subr.bf16.mxu0 0
        %1033 = vmatpush2.bf16.msra.mxu0 0
        %1034 = vmatprep.subr.bf16.mxu0 0
        %1035 = vmatpush2.bf16.msra.mxu0 0
        %1036 = vmatprep.subr.bf16.mxu0 0
        %1037 = vmatpush2.bf16.msra.mxu0 0
        %1038 = vmatprep.subr.bf16.mxu0 0
        %1039 = vmatpush2.bf16.msra.mxu0 0
        %1040 = vmatprep.mubr.bf16.mxu0 0
        %1041 = vmatmul.mubr.bf16.gmra.mxu0 %v1002
        %v1042 = vpop.f32.mrf.mxu0
        %v1043 = vadd.f32 0.0, %v1042
        %v1044 = vpop.f32.mrf.mxu0
        %v1045 = vpop.f32.mrf.mxu0
        %v1046 = vpop.f32.mrf.mxu0
        %1047 = vdwg.mxu0
        %v1049 = vsel %vm766, %v998, 0
        %v1052 = vsel %vm1004, %v763, 0
        %1054 = vmatprep.subr.bf16.mxu0 0
        %1055 = vmatpush1.bf16.msra.mxu0 0
        %1056 = vmatprep.subr.bf16.mxu0 0
        %1057 = vmatpush1.bf16.msra.mxu0 0
        %1058 = vmatprep.subr.bf16.mxu0 0
        %1059 = vmatpush1.bf16.msra.mxu0 0
        %1060 = vmatprep.subr.bf16.mxu0 0
        %1061 = vmatpush1.bf16.msra.mxu0 0
        %1062 = vmatprep.subr.bf16.mxu0 0
        %1063 = vmatpush1.bf16.msra.mxu0 0
        %1064 = vmatprep.subr.bf16.mxu0 0
        %1065 = vmatpush1.bf16.msra.mxu0 0
        %1066 = vmatprep.subr.bf16.mxu0 0
        %1067 = vmatpush1.bf16.msra.mxu0 0
        %1068 = vmatprep.subr.bf16.mxu0 0
        %1069 = vmatpush1.bf16.msra.mxu0 %v1052
        %1070 = vmatprep.subr.bf16.mxu0 0
        %1071 = vmatpush2.bf16.msra.mxu0 0
        %1072 = vmatprep.subr.bf16.mxu0 0
        %1073 = vmatpush2.bf16.msra.mxu0 0
        %1074 = vmatprep.subr.bf16.mxu0 0
        %1075 = vmatpush2.bf16.msra.mxu0 0
        %1076 = vmatprep.subr.bf16.mxu0 0
        %1077 = vmatpush2.bf16.msra.mxu0 0
        %1078 = vmatprep.subr.bf16.mxu0 0
        %1079 = vmatpush2.bf16.msra.mxu0 0
        %1080 = vmatprep.subr.bf16.mxu0 0
        %1081 = vmatpush2.bf16.msra.mxu0 0
        %1082 = vmatprep.subr.bf16.mxu0 0
        %1083 = vmatpush2.bf16.msra.mxu0 0
        %1084 = vmatprep.subr.bf16.mxu0 0
        %1085 = vmatpush2.bf16.msra.mxu0 0
        %1086 = vmatprep.mubr.bf16.mxu0 0
        %1087 = vmatmul.mubr.bf16.gmra.mxu0 %v1049
        %v1088 = vpop.f32.mrf.mxu0
        %v1089 = vadd.f32 0.0, %v1088
        %v1090 = vpop.f32.mrf.mxu0
        %v1091 = vpop.f32.mrf.mxu0
        %v1092 = vpop.f32.mrf.mxu0
        %1093 = vdwg.mxu0
        %v1095 = vsel %vm766, %v999, 0
        %v1098 = vsel %vm1004, %v764, 0
        %1100 = vmatprep.subr.bf16.mxu0 0
        %1101 = vmatpush1.bf16.msra.mxu0 0
        %1102 = vmatprep.subr.bf16.mxu0 0
        %1103 = vmatpush1.bf16.msra.mxu0 0
        %1104 = vmatprep.subr.bf16.mxu0 0
        %1105 = vmatpush1.bf16.msra.mxu0 0
        %1106 = vmatprep.subr.bf16.mxu0 0
        %1107 = vmatpush1.bf16.msra.mxu0 0
        %1108 = vmatprep.subr.bf16.mxu0 0
        %1109 = vmatpush1.bf16.msra.mxu0 0
        %1110 = vmatprep.subr.bf16.mxu0 0
        %1111 = vmatpush1.bf16.msra.mxu0 0
        %1112 = vmatprep.subr.bf16.mxu0 0
        %1113 = vmatpush1.bf16.msra.mxu0 0
        %1114 = vmatprep.subr.bf16.mxu0 0
        %1115 = vmatpush1.bf16.msra.mxu0 %v1098
        %1116 = vmatprep.subr.bf16.mxu0 0
        %1117 = vmatpush2.bf16.msra.mxu0 0
        %1118 = vmatprep.subr.bf16.mxu0 0
        %1119 = vmatpush2.bf16.msra.mxu0 0
        %1120 = vmatprep.subr.bf16.mxu0 0
        %1121 = vmatpush2.bf16.msra.mxu0 0
        %1122 = vmatprep.subr.bf16.mxu0 0
        %1123 = vmatpush2.bf16.msra.mxu0 0
        %1124 = vmatprep.subr.bf16.mxu0 0
        %1125 = vmatpush2.bf16.msra.mxu0 0
        %1126 = vmatprep.subr.bf16.mxu0 0
        %1127 = vmatpush2.bf16.msra.mxu0 0
        %1128 = vmatprep.subr.bf16.mxu0 0
        %1129 = vmatpush2.bf16.msra.mxu0 0
        %1130 = vmatprep.subr.bf16.mxu0 0
        %1131 = vmatpush2.bf16.msra.mxu0 0
        %1132 = vmatprep.mubr.bf16.mxu0 0
        %1133 = vmatmul.mubr.bf16.gmra.mxu0 %v1095
        %v1134 = vpop.f32.mrf.mxu0
        %v1135 = vadd.f32 0.0, %v1134
        %v1136 = vpop.f32.mrf.mxu0
        %v1137 = vpop.f32.mrf.mxu0
        %v1138 = vpop.f32.mrf.mxu0
        %1139 = vdwg.mxu0
        %v1141 = vsel %vm766, %v1000, 0
        %v1144 = vsel %vm1004, %v765, 0
        %1146 = vmatprep.subr.bf16.mxu0 0
        %1147 = vmatpush1.bf16.msra.mxu0 0
        %1148 = vmatprep.subr.bf16.mxu0 0
        %1149 = vmatpush1.bf16.msra.mxu0 0
        %1150 = vmatprep.subr.bf16.mxu0 0
        %1151 = vmatpush1.bf16.msra.mxu0 0
        %1152 = vmatprep.subr.bf16.mxu0 0
        %1153 = vmatpush1.bf16.msra.mxu0 0
        %1154 = vmatprep.subr.bf16.mxu0 0
        %1155 = vmatpush1.bf16.msra.mxu0 0
        %1156 = vmatprep.subr.bf16.mxu0 0
        %1157 = vmatpush1.bf16.msra.mxu0 0
        %1158 = vmatprep.subr.bf16.mxu0 0
        %1159 = vmatpush1.bf16.msra.mxu0 0
        %1160 = vmatprep.subr.bf16.mxu0 0
        %1161 = vmatpush1.bf16.msra.mxu0 %v1144
        %1162 = vmatprep.subr.bf16.mxu0 0
        %1163 = vmatpush2.bf16.msra.mxu0 0
        %1164 = vmatprep.subr.bf16.mxu0 0
        %1165 = vmatpush2.bf16.msra.mxu0 0
        %1166 = vmatprep.subr.bf16.mxu0 0
        %1167 = vmatpush2.bf16.msra.mxu0 0
        %1168 = vmatprep.subr.bf16.mxu0 0
        %1169 = vmatpush2.bf16.msra.mxu0 0
        %1170 = vmatprep.subr.bf16.mxu0 0
        %1171 = vmatpush2.bf16.msra.mxu0 0
        %1172 = vmatprep.subr.bf16.mxu0 0
        %1173 = vmatpush2.bf16.msra.mxu0 0
        %1174 = vmatprep.subr.bf16.mxu0 0
        %1175 = vmatpush2.bf16.msra.mxu0 0
        %1176 = vmatprep.subr.bf16.mxu0 0
        %1177 = vmatpush2.bf16.msra.mxu0 0
        %1178 = vmatprep.mubr.bf16.mxu0 0
        %1179 = vmatmul.mubr.bf16.gmra.mxu0 %v1141
        %v1180 = vpop.f32.mrf.mxu0
        %v1181 = vadd.f32 0.0, %v1180
        %v1182 = vpop.f32.mrf.mxu0
        %v1183 = vpop.f32.mrf.mxu0
        %v1184 = vpop.f32.mrf.mxu0
        %1185 = vdwg.mxu0
        %v1186 = vrcp.pop %v987
        %v1187 = vrcp.pop %v990
        %v1188 = vrcp.pop %v993
        %v1189 = vrcp.pop %v996
        %v1190 = vmul.f32 %v1043, %v1186
        %v1191 = vmul.f32 %v1089, %v1187
        %v1192 = vmul.f32 %v1135, %v1188
        %v1193 = vmul.f32 %v1181, %v1189
        %v1194 = vpack.c.bf16 %v1190, %v1190
        %1195 = vst.msk [vmem:[#allocation6] sm:$0xf] %vm736, %v1194
        %v1196 = vpack.c.bf16 %v1191, %v1191
        %v1198 = vunpack.c.l.b16 %v1196
        %v1199 = vpack.c.b16 %v1198, %v1198
        %1200 = vrot.lane.b32.xlu0 %v1199, 8
        %v1201 = vpop.permute.xlu0 %1200
        %vm1203 = vcmask 126016
        %1204 = vst.msk [vmem:[#allocation6] sm:$0xf] %vm1203, %v1201
        %v1205 = vpack.c.bf16 %v1192, %v1192
        %v1207 = vunpack.c.l.b16 %v1205
        %v1208 = vpack.c.b16 %v1207, %v1207
        %1209 = vrot.lane.b32.xlu0 %v1208, 16
        %v1210 = vpop.permute.xlu0 %1209
        %vm1212 = vcmask 191616
        %1213 = vst.msk [vmem:[#allocation6] sm:$0xf] %vm1212, %v1210
        %v1214 = vpack.c.bf16 %v1193, %v1193
        %v1216 = vunpack.c.l.b16 %v1214
        %v1217 = vpack.c.b16 %v1216, %v1216
        %1218 = vrot.lane.b32.xlu0 %v1217, 24
        %v1219 = vpop.permute.xlu0 %1218
        %vm1221 = vcmask 257216
        %1222 = vst.msk [vmem:[#allocation6] sm:$0xf] %vm1221, %v1219
        %v1223 = vld [vmem:[#allocation6] sm:$0xf]
        %v1224 = vld [vmem:[#allocation10] sm:$0xf]
        %v1225 = vld [vmem:[#allocation10 + $0x4] sm:$0xf]
        %v1226 = vld [vmem:[#allocation10 + $0x8] sm:$0xf]
        %v1227 = vld [vmem:[#allocation10 + $0xc] sm:$0xf]
        %v1228 = vld [vmem:[%s6] sm:$0x1]
        %v1230 = vlaneseq
        %v1231 = vshrl.u32 %v1230, 7
        %v1232 = vsub.s32 0, %v1231
        %v1233 = vrot.slane %v1228, %v1232
        %v1239 = vunpack.c.l.b16 %v1224
        %v1240 = vunpack.c.l.b16 %v1225
        %v1241 = vunpack.c.l.b16 %v1226
        %v1242 = vunpack.c.l.b16 %v1227
        %v1243 = vpack.c.b16 %v1240, %v1239
        %v1244 = vpack.c.b16 %v1242, %v1241
        %vm1247 = vcmask 261120
        %v1249 = vsel %vm1247, %v1223, 0
        %1251 = vmatprep.subr.bf16.mxu0 0
        %1252 = vmatpush1.bf16.msra.mxu0 0
        %1253 = vmatprep.subr.bf16.mxu0 0
        %1254 = vmatpush1.bf16.msra.mxu0 0
        %1255 = vmatprep.subr.bf16.mxu0 0
        %1256 = vmatpush1.bf16.msra.mxu0 0
        %1257 = vmatprep.subr.bf16.mxu0 0
        %1258 = vmatpush1.bf16.msra.mxu0 0
        %1259 = vmatprep.subr.bf16.mxu0 0
        %1260 = vmatpush1.bf16.msra.mxu0 0
        %1261 = vmatprep.subr.bf16.mxu0 0
        %1262 = vmatpush1.bf16.msra.mxu0 0
        %1263 = vmatprep.subr.bf16.mxu0 0
        %1264 = vmatpush1.bf16.msra.mxu0 %v1244
        %1265 = vmatprep.subr.bf16.mxu0 0
        %1266 = vmatpush1.bf16.msra.mxu0 %v1243
        %1267 = vmatprep.subr.bf16.mxu0 0
        %1268 = vmatpush2.bf16.msra.mxu0 0
        %1269 = vmatprep.subr.bf16.mxu0 0
        %1270 = vmatpush2.bf16.msra.mxu0 0
        %1271 = vmatprep.subr.bf16.mxu0 0
        %1272 = vmatpush2.bf16.msra.mxu0 0
        %1273 = vmatprep.subr.bf16.mxu0 0
        %1274 = vmatpush2.bf16.msra.mxu0 0
        %1275 = vmatprep.subr.bf16.mxu0 0
        %1276 = vmatpush2.bf16.msra.mxu0 0
        %1277 = vmatprep.subr.bf16.mxu0 0
        %1278 = vmatpush2.bf16.msra.mxu0 0
        %1279 = vmatprep.subr.bf16.mxu0 0
        %1280 = vmatpush2.bf16.msra.mxu0 0
        %1281 = vmatprep.subr.bf16.mxu0 0
        %1282 = vmatpush2.bf16.msra.mxu0 0
        %1283 = vmatprep.mubr.bf16.mxu0 0
        %1284 = vmatmul.mubr.bf16.gmra.mxu0 %v1249
        %v1285 = vpop.f32.mrf.mxu0
        %v1286 = vadd.f32 %v1233, %v1285
        %v1287 = vpop.f32.mrf.mxu0
        %v1288 = vpop.f32.mrf.mxu0
        %v1289 = vpop.f32.mrf.mxu0
        %1290 = vdwg.mxu0
        %v1291 = vld [vmem:[%s613] sm:$0xff]
        %v1292 = vadd.f32 %v1291, %v1286
        %v1293 = vld [vmem:[%s7] sm:$0x1]
        %v1294 = vld [vmem:[%s8] sm:$0x1]
        %v1295 = vsel %vm1247, %v1292, 0.0
        %1296 = vadd.xlane.f32.xlu0 %v1295
        %v1297 = vpop.xlane.xlu0 %1296
        %v1298 = vrcp.pop 32.0
        %v1299 = vmul.f32 %v1297, %v1298
        %v1300 = vsub.f32 %v1292, %v1299
        %v1301 = vmul.f32 %v1300, %v1300
        %v1302 = vsel %vm1247, %v1301, 0.0
        %1303 = vadd.xlane.f32.xlu0 %v1302
        %v1304 = vpop.xlane.xlu0 %1303
        %v1305 = vmul.f32 %v1304, %v1298
        %v1306 = vadd.f32 %v1305, 1e-05
        %v1307 = vrsqrt.pop %v1306
        %v1308 = vmul.f32 %v1300, %v1307
        %v1310 = vlaneseq
        %v1311 = vshrl.u32 %v1310, 7
        %v1312 = vsub.s32 0, %v1311
        %v1313 = vrot.slane %v1293, %v1312
        %v1315 = vmul.f32 %v1308, %v1313
        %v1317 = vlaneseq
        %v1318 = vshrl.u32 %v1317, 7
        %v1319 = vsub.s32 0, %v1318
        %v1320 = vrot.slane %v1294, %v1319
        %v1322 = vadd.f32 %v1315, %v1320
        %v1323 = vpack.c.bf16 %v1322, %v1322
        %v1324 = vld [vmem:[#allocation12] sm:$0xf]
        %v1325 = vld [vmem:[#allocation12 + $0x4] sm:$0xf]
        %v1326 = vld [vmem:[#allocation12 + $0x8] sm:$0xf]
        %v1327 = vld [vmem:[#allocation12 + $0xc] sm:$0xf]
        %v1328 = vld [vmem:[#allocation13] sm:$0x1]
        %v1330 = vlaneseq
        %v1331 = vshrl.u32 %v1330, 7
        %v1332 = vsub.s32 0, %v1331
        %v1333 = vrot.slane %v1328, %v1332
        %v1339 = vunpack.c.l.b16 %v1324
        %v1340 = vunpack.c.l.b16 %v1325
        %v1341 = vunpack.c.l.b16 %v1326
        %v1342 = vunpack.c.l.b16 %v1327
        %v1343 = vpack.c.b16 %v1340, %v1339
        %v1344 = vpack.c.b16 %v1342, %v1341
        %v1348 = vsel %vm1247, %v1323, 0
        %1350 = vmatprep.subr.bf16.mxu0 0
        %1351 = vmatpush1.bf16.msra.mxu0 0
        %1352 = vmatprep.subr.bf16.mxu0 0
        %1353 = vmatpush1.bf16.msra.mxu0 0
        %1354 = vmatprep.subr.bf16.mxu0 0
        %1355 = vmatpush1.bf16.msra.mxu0 0
        %1356 = vmatprep.subr.bf16.mxu0 0
        %1357 = vmatpush1.bf16.msra.mxu0 0
        %1358 = vmatprep.subr.bf16.mxu0 0
        %1359 = vmatpush1.bf16.msra.mxu0 0
        %1360 = vmatprep.subr.bf16.mxu0 0
        %1361 = vmatpush1.bf16.msra.mxu0 0
        %1362 = vmatprep.subr.bf16.mxu0 0
        %1363 = vmatpush1.bf16.msra.mxu0 %v1344
        %1364 = vmatprep.subr.bf16.mxu0 0
        %1365 = vmatpush1.bf16.msra.mxu0 %v1343
        %1366 = vmatprep.subr.bf16.mxu0 0
        %1367 = vmatpush2.bf16.msra.mxu0 0
        %1368 = vmatprep.subr.bf16.mxu0 0
        %1369 = vmatpush2.bf16.msra.mxu0 0
        %1370 = vmatprep.subr.bf16.mxu0 0
        %1371 = vmatpush2.bf16.msra.mxu0 0
        %1372 = vmatprep.subr.bf16.mxu0 0
        %1373 = vmatpush2.bf16.msra.mxu0 0
        %1374 = vmatprep.subr.bf16.mxu0 0
        %1375 = vmatpush2.bf16.msra.mxu0 0
        %1376 = vmatprep.subr.bf16.mxu0 0
        %1377 = vmatpush2.bf16.msra.mxu0 0
        %1378 = vmatprep.subr.bf16.mxu0 0
        %1379 = vmatpush2.bf16.msra.mxu0 0
        %1380 = vmatprep.subr.bf16.mxu0 0
        %1381 = vmatpush2.bf16.msra.mxu0 0
        %1382 = vmatprep.mubr.bf16.mxu0 0
        %1383 = vmatmul.mubr.bf16.gmra.mxu0 %v1348
        %v1384 = vpop.f32.mrf.mxu0
        %v1385 = vadd.f32 %v1333, %v1384
        %v1386 = vpop.f32.mrf.mxu0
        %v1387 = vpop.f32.mrf.mxu0
        %v1388 = vpop.f32.mrf.mxu0
        %1389 = vdwg.mxu0
        %v1390 = vmax.f32 %v1385, 0.0
        %v1391 = vpack.c.bf16 %v1390, %v1390
        %v1392 = vld [vmem:[%s11] sm:$0xf]
        %v1393 = vld [vmem:[%s11 + $0x4] sm:$0xf]
        %v1394 = vld [vmem:[%s11 + $0x8] sm:$0xf]
        %v1395 = vld [vmem:[%s11 + $0xc] sm:$0xf]
        %v1396 = vld [vmem:[%s11 + $0x10] sm:$0xf]
        %v1397 = vld [vmem:[%s11 + $0x14] sm:$0xf]
        %v1398 = vld [vmem:[%s11 + $0x18] sm:$0xf]
        %v1399 = vld [vmem:[%s11 + $0x1c] sm:$0xf]
        %v1400 = vld [vmem:[%s12] sm:$0x1]
        %v1402 = vlaneseq
        %v1403 = vshrl.u32 %v1402, 7
        %v1404 = vsub.s32 0, %v1403
        %v1405 = vrot.slane %v1400, %v1404
        %v1415 = vunpack.c.l.b16 %v1392
        %v1416 = vunpack.c.l.b16 %v1393
        %v1417 = vunpack.c.l.b16 %v1394
        %v1418 = vunpack.c.l.b16 %v1395
        %v1419 = vunpack.c.l.b16 %v1396
        %v1420 = vunpack.c.l.b16 %v1397
        %v1421 = vunpack.c.l.b16 %v1398
        %v1422 = vunpack.c.l.b16 %v1399
        %v1423 = vpack.c.b16 %v1416, %v1415
        %v1424 = vpack.c.b16 %v1418, %v1417
        %v1425 = vpack.c.b16 %v1420, %v1419
        %v1426 = vpack.c.b16 %v1422, %v1421
        %vm1431 = vcmask 523264
        %v1433 = vsel %vm1431, %v1391, 0
        %1435 = vmatprep.subr.bf16.mxu0 0
        %1436 = vmatpush1.bf16.msra.mxu0 0
        %1437 = vmatprep.subr.bf16.mxu0 0
        %1438 = vmatpush1.bf16.msra.mxu0 0
        %1439 = vmatprep.subr.bf16.mxu0 0
        %1440 = vmatpush1.bf16.msra.mxu0 0
        %1441 = vmatprep.subr.bf16.mxu0 0
        %1442 = vmatpush1.bf16.msra.mxu0 0
        %1443 = vmatprep.subr.bf16.mxu0 0
        %1444 = vmatpush1.bf16.msra.mxu0 %v1426
        %1445 = vmatprep.subr.bf16.mxu0 0
        %1446 = vmatpush1.bf16.msra.mxu0 %v1425
        %1447 = vmatprep.subr.bf16.mxu0 0
        %1448 = vmatpush1.bf16.msra.mxu0 %v1424
        %1449 = vmatprep.subr.bf16.mxu0 0
        %1450 = vmatpush1.bf16.msra.mxu0 %v1423
        %1451 = vmatprep.subr.bf16.mxu0 0
        %1452 = vmatpush2.bf16.msra.mxu0 0
        %1453 = vmatprep.subr.bf16.mxu0 0
        %1454 = vmatpush2.bf16.msra.mxu0 0
        %1455 = vmatprep.subr.bf16.mxu0 0
        %1456 = vmatpush2.bf16.msra.mxu0 0
        %1457 = vmatprep.subr.bf16.mxu0 0
        %1458 = vmatpush2.bf16.msra.mxu0 0
        %1459 = vmatprep.subr.bf16.mxu0 0
        %1460 = vmatpush2.bf16.msra.mxu0 0
        %1461 = vmatprep.subr.bf16.mxu0 0
        %1462 = vmatpush2.bf16.msra.mxu0 0
        %1463 = vmatprep.subr.bf16.mxu0 0
        %1464 = vmatpush2.bf16.msra.mxu0 0
        %1465 = vmatprep.subr.bf16.mxu0 0
        %1466 = vmatpush2.bf16.msra.mxu0 0
        %1467 = vmatprep.mubr.bf16.mxu0 0
        %1468 = vmatmul.mubr.bf16.gmra.mxu0 %v1433
        %v1469 = vpop.f32.mrf.mxu0
        %v1470 = vadd.f32 %v1405, %v1469
        %v1471 = vpop.f32.mrf.mxu0
        %v1472 = vpop.f32.mrf.mxu0
        %v1473 = vpop.f32.mrf.mxu0
        %1474 = vdwg.mxu0
        %v1475 = vadd.f32 %v1322, %v1470
        %v1476 = vld [vmem:[%s13] sm:$0x1]
        %v1477 = vld [vmem:[%s14] sm:$0x1]
        %v1478 = vsel %vm1247, %v1475, 0.0
        %1479 = vadd.xlane.f32.xlu0 %v1478
        %v1480 = vpop.xlane.xlu0 %1479
        %v1481 = vmul.f32 %v1480, %v1298
        %v1482 = vsub.f32 %v1475, %v1481
        %v1483 = vmul.f32 %v1482, %v1482
        %v1484 = vsel %vm1247, %v1483, 0.0
        %1485 = vadd.xlane.f32.xlu0 %v1484
        %v1486 = vpop.xlane.xlu0 %1485
        %v1487 = vmul.f32 %v1486, %v1298
        %v1488 = vadd.f32 %v1487, 1e-05
        %v1489 = vrsqrt.pop %v1488
        %v1490 = vmul.f32 %v1482, %v1489
        %v1492 = vlaneseq
        %v1493 = vshrl.u32 %v1492, 7
        %v1494 = vsub.s32 0, %v1493
        %v1495 = vrot.slane %v1476, %v1494
        %v1497 = vmul.f32 %v1490, %v1495
        %v1499 = vlaneseq
        %v1500 = vshrl.u32 %v1499, 7
        %v1501 = vsub.s32 0, %v1500
        %v1502 = vrot.slane %v1477, %v1501
        %v1504 = vadd.f32 %v1497, %v1502
        %1505 = vst.msk [vmem:[%s602] sm:$0xff] %vm1247, %v1504
        %s1506 = sand.u32 %s390, 1
        %s1507 = scalar_lea.sflag [#allocation9], %s1506
        %s1508 = sand.u32 %s390, 1
        %s1509 = smul.addr %s1508, 8
        %s1510 = scalar_lea.vmem [#allocation15], %s1509
        // Predicated region
        $region101: #{tpu_custom_call.1} parent=79 // pred_check
          %p1511 = pneg %p400
        $region102: #{tpu_custom_call.1} parent=79 // pred_check_branch
          %1513 = sbr.rel (%p1511) target = $region104
        $region103: #{tpu_custom_call.1} parent=79 // pred_region
          %s1515 = ssub.s32 128, 128
          %1516 = vsyncadd %s1507, %s1515
          %s1517 = sadd.s32 %s39, %s38
          %s1518 = smul.addr %s1517, 128
          %s1519 = scalar_lea.hbm %s15, %s1518
          %s1521 = sshll.u32 %s1510, 4
          %s1522 = int_to_ptr.vmem [resolvable:$true] %s1521
          %1524 = dma.vmem_to_hbm [thread:$0]  %s1522, 128, %s1519, %s1507
        $region104: #{tpu_custom_call.1} parent=79 // pred_fallthru
          _
      $region80: #{tpu_custom_call.1} parent=5 // pred_fallthru
        _
      %p1525 = scmp.le.s32.totalorder 2, %s29
      // Predicated region
      $region105: #{tpu_custom_call.1} parent=5 // pred_check
        %p1526 = pneg %p1525
      $region106: #{tpu_custom_call.1} parent=5 // pred_check_branch
        %1528 = sbr.rel (%p1526) target = $region108
      $region107: #{tpu_custom_call.1} parent=5 // pred_region
        %s1529 = ssub.s32 %s29, 2
        // Predicated region
        $region109: #{tpu_custom_call.1} parent=107 // pred_check
          %p1530 = pneg %p406
        $region110: #{tpu_custom_call.1} parent=107 // pred_check_branch
          %1532 = sbr.rel (%p1530) target = $region112
        $region111: #{tpu_custom_call.1} parent=107 // pred_region
          %s1533 = sand.u32 %s391, 1
          %s1534 = scalar_lea.sflag [#allocation9], %s1533
          %s1535 = sand.u32 %s391, 1
          %s1536 = smul.addr %s1535, 8
          %s1537 = scalar_lea.vmem [#allocation15], %s1536
          %1538 = dma.done %s1534, 128
        $region112: #{tpu_custom_call.1} parent=107 // pred_fallthru
          _
      $region108: #{tpu_custom_call.1} parent=5 // pred_fallthru
        _
    $region6: #{tpu_custom_call.1} parent=1 // loop_footer
      %s33 = sadd.s32 1, %s29
    $region7: #{tpu_custom_call.1} parent=1 // loop_footer_branch
      %28 = sbr.rel target = $region3
    $region8: #{tpu_custom_call.1} parent=1 // loop_exit
      _
    %1539 = vsyncpa [#allocation8], 1
    %s1540 = scalar_lea.sflag [#allocation8], 1
    %1541 = vsyncpa %s1540, 1
    %1542 = vsyncpa [#allocation11], 1
    %1543 = vsyncpa [#allocation14], 1
    %1544 = vsyncpa [#allocation9], 1
    %s1545 = scalar_lea.sflag [#allocation9], 1
    %1546 = vsyncpa %s1545, 1

</llo_original>
